<compile_context>
chip_gen: v5e
topology: v5e:2x2
jax: 0.10.0
libtpu: 0.0.40
codegen_flags: <defaults>
</compile_context>

<pallas_src>
import functools

import jax
import jax.numpy as jnp
from jax.experimental import pallas as pl
from jax.experimental.pallas import tpu as pltpu

_LANE = 128


def _round_up(x, m):
    return (x + m - 1) // m * m


def _vmem_budget_bytes():
    """Generation-aware usable-VMEM target (with headroom) for tiling + limit."""
    cap = 64 * 1024 * 1024                      # conservative default (v7x physical)
    try:
        cap = int(pltpu.get_tpu_info().vmem_capacity_bytes)
    except Exception:
        pass
    return min(max(int(cap * 0.6), 24 * 1024 * 1024), 96 * 1024 * 1024)


def _pick_tile_h(h_out, w_out, wp, cinp, coutp, khkw, halo,
                 in_bytes, w_bytes, conv_bytes, budget, max_m):
    """Largest divisor of Hout whose estimated per-step VMEM footprint fits."""
    weight_b = khkw * cinp * coutp * w_bytes          # resident once (single copy)
    best = 1
    for t in range(1, h_out + 1):
        if h_out % t:
            continue
        m = t * w_out
        if m > max_m:
            continue
        band_b = (t + halo) * wp * cinp * in_bytes    # x2: auto double-buffered
        conv_b = m * coutp * conv_bytes               # x2: pipelined output
        acc_b = m * coutp * 4                         # f32 accumulator + temps
        est = 2 * band_b + weight_b + 2 * conv_b + 3 * acc_b + (1 << 20)
        if est <= budget:
            best = max(best, t)
    # TODO(synk): for prime Hout / misaligned M this degrades to tile_h=1; a
    # cdiv grid with masked partial tiles (and masked BN stats) would keep
    # M 8-aligned and >=256 on v6e/v7x.
    return best


def _conv_stats_kernel(band_ref, w_ref, conv_ref, stats_ref,
                       *, tile_h, w_out, n_kh, n_kw, dilation, cinp, coutp):
    """Pass 1: dilated conv for one (batch, H-tile) + per-tile BN partial stats.

    band_ref : (1, 1, band_h, Wp, Cinp) halo'd input band (auto double-buffered)
    w_ref    : (KH*KW, Cinp, Coutp)     full weight, VMEM-resident single copy
    conv_ref : (1, tile_h, Wout, Coutp) conv output tile (conv_dtype, e.g. bf16)
    stats_ref: (1, 1, 2, Coutp)         per-tile [sum, sum_sq] in f32
    """
    x = band_ref[...]                               # native dtype; f32 accumulate
    m = tile_h * w_out

    acc = None
    tap = 0
    for kh in range(n_kh):                          # statically unrolled tap loop
        for kw in range(n_kw):
            x_tap = x[0, 0,
                      kh * dilation:kh * dilation + tile_h,
                      kw * dilation:kw * dilation + w_out, :]   # (tile_h, Wout, Cinp)
            y = jnp.dot(x_tap.reshape(m, cinp), w_ref[tap],
                        preferred_element_type=jnp.float32)     # (M, Coutp) on MXU
            acc = y if acc is None else acc + y
            tap += 1

    conv_ref[...] = acc.reshape(1, tile_h, w_out, coutp).astype(conv_ref.dtype)

    # BN partial statistics from the f32 accumulator (before any downcast).
    s = jnp.sum(acc, axis=0, keepdims=True)             # (1, Coutp)
    sq = jnp.sum(acc * acc, axis=0, keepdims=True)      # (1, Coutp)
    stats_ref[...] = jnp.concatenate([s, sq], axis=0).reshape(1, 1, 2, coutp)


def _bn_relu_kernel(conv_ref, scale_ref, shift_ref, out_ref):
    """Pass 2: y = conv * scale + shift, ReLU. Mem-bound elementwise sweep."""
    y = conv_ref[...].astype(jnp.float32) * scale_ref[...] + shift_ref[...]
    out_ref[...] = jnp.maximum(y, 0.0).astype(out_ref.dtype)


def aspp_forward(x_nchw, weight_oihw, gamma, beta, *, padding, dilation,
                 eps=1e-5, conv_dtype=jnp.bfloat16, max_m=512):
    """NCHW in / NCHW out, matching PyTorch _ASPPModule.forward (training-mode BN)."""
    N, Cin, H, W = x_nchw.shape
    Cout, _, KH, KW = weight_oihw.shape

    halo = dilation * (KH - 1)
    Hout = H + 2 * padding - halo
    Wout = W + 2 * padding - dilation * (KW - 1)
    Hp = H + 2 * padding
    Wp = W + 2 * padding

    # TODO(synk): lane padding to 128 is wasteful for toy channel counts (Cin=4,
    # Cout=8); production ASPP sizes (Cin/Cout multiples of 128) pay nothing.
    Cinp = _round_up(Cin, _LANE)
    Coutp = _round_up(Cout, _LANE)

    # ---- layout glue (plain XLA): NHWC, spatial zero-pad, lane-pad channels ----
    x_nhwc = jnp.transpose(x_nchw, (0, 2, 3, 1))
    xpad = jnp.pad(x_nhwc, ((0, 0), (padding, padding), (padding, padding),
                            (0, Cinp - Cin)))

    w_hwio = jnp.transpose(weight_oihw, (2, 3, 1, 0))                 # (KH,KW,Cin,Cout)
    w_p = jnp.pad(w_hwio, ((0, 0), (0, 0), (0, Cinp - Cin), (0, Coutp - Cout)))
    w_taps = w_p.reshape(KH * KW, Cinp, Coutp)                        # per-tap weights

    gamma_p = jnp.pad(gamma.astype(jnp.float32), (0, Coutp - Cout))
    beta_p = jnp.pad(beta.astype(jnp.float32), (0, Coutp - Cout))

    in_bytes = jnp.dtype(xpad.dtype).itemsize
    w_bytes = jnp.dtype(w_taps.dtype).itemsize
    conv_bytes = jnp.dtype(conv_dtype).itemsize
    budget = _vmem_budget_bytes()

    tile_h = _pick_tile_h(Hout, Wout, Wp, Cinp, Coutp, KH * KW, halo,
                          in_bytes, w_bytes, conv_bytes, budget, max_m)
    n_ht = Hout // tile_h
    band_h = tile_h + halo

    # Pre-gather overlapping halo'd row bands so BlockSpec auto-pipelining
    # (double buffering) hides the band DMA behind the matmul.
    if n_ht == 1:
        bands = xpad[:, None]                                          # (N,1,Hp,Wp,Cinp)
    else:
        row_idx = jnp.arange(n_ht)[:, None] * tile_h + jnp.arange(band_h)[None, :]
        bands = xpad[:, row_idx]                                       # (N,n_ht,band_h,Wp,Cinp)

    cparams1 = pltpu.CompilerParams(
        dimension_semantics=("parallel", "parallel"), vmem_limit_bytes=budget)
    cparams2 = pltpu.CompilerParams(
        dimension_semantics=("parallel",), vmem_limit_bytes=budget)

    kernel1 = functools.partial(
        _conv_stats_kernel, tile_h=tile_h, w_out=Wout, n_kh=KH, n_kw=KW,
        dilation=dilation, cinp=Cinp, coutp=Coutp)

    flops = 2 * N * Hout * Wout * KH * KW * Cinp * Coutp
    bytes_accessed = (bands.size * in_bytes + w_taps.size * w_bytes
                      + N * Hout * Wout * Coutp * conv_bytes
                      + N * n_ht * 2 * Coutp * 4)

    # ---- Pass 1: gridded conv + per-tile BN partial stats ----------------------
    conv, stats = pl.pallas_call(
        kernel1,
        out_shape=(
            jax.ShapeDtypeStruct((N, Hout, Wout, Coutp), conv_dtype),
            jax.ShapeDtypeStruct((N, n_ht, 2, Coutp), jnp.float32),
        ),
        grid_spec=pltpu.PrefetchScalarGridSpec(
            num_scalar_prefetch=0,
            grid=(N, n_ht),
            in_specs=[
                pl.BlockSpec((1, 1, band_h, Wp, Cinp),
                             lambda n, h: (n, h, 0, 0, 0)),
                # whole weight resident in VMEM once (no per-step double buffer)
                pl.BlockSpec(memory_space=pltpu.MemorySpace.VMEM),
            ],
            out_specs=[
                pl.BlockSpec((1, tile_h, Wout, Coutp), lambda n, h: (n, h, 0, 0)),
                pl.BlockSpec((1, 1, 2, Coutp), lambda n, h: (n, h, 0, 0)),
            ]),
        compiler_params=cparams1,
        cost_estimate=pl.CostEstimate(flops=flops, transcendentals=0,
                                      bytes_accessed=bytes_accessed),
    )(bands, w_taps)

    # ---- tiny per-channel reduction + BN fold (plain JAX glue) -----------------
    m_count = jnp.float32(N * Hout * Wout)
    tot = stats.sum(axis=(0, 1))                                   # (2, Coutp)
    mean = tot[0] / m_count
    var = jnp.maximum(tot[1] / m_count - mean * mean, 0.0)         # biased variance
    inv_std = jax.lax.rsqrt(var + eps)
    scale = (gamma_p * inv_std).reshape(1, Coutp)
    shift = (beta_p - mean * gamma_p * inv_std).reshape(1, Coutp)

    # ---- Pass 2: BN apply + ReLU on a flattened, multi-MB-tile view ------------
    rows = N * Hout * Wout
    conv2d = conv.reshape(rows, Coutp)
    rows_blk = rows if rows <= 4096 else 4096            # mult of 8, multi-MB tile
    n_rb = pl.cdiv(rows, rows_blk)

    out2d = pl.pallas_call(
        _bn_relu_kernel,
        out_shape=jax.ShapeDtypeStruct((rows, Coutp), x_nchw.dtype),
        grid=(n_rb,),
        in_specs=[
            pl.BlockSpec((rows_blk, Coutp), lambda i: (i, 0)),
            pl.BlockSpec((1, Coutp), lambda i: (0, 0)),
            pl.BlockSpec((1, Coutp), lambda i: (0, 0)),
        ],
        out_specs=pl.BlockSpec((rows_blk, Coutp), lambda i: (i, 0)),
        compiler_params=cparams2,
    )(conv2d, scale, shift)

    out_nhwc = out2d.reshape(N, Hout, Wout, Coutp)[..., :Cout]
    return jnp.transpose(out_nhwc, (0, 3, 1, 2))                   # back to NCHW


def _reference(x, w, gamma, beta, padding, dilation, eps=1e-5):
    """Pure-JAX reference (NCHW), mirrors PyTorch training-mode forward."""
    conv = jax.lax.conv_general_dilated(
        x, w, window_strides=(1, 1),
        padding=[(padding, padding), (padding, padding)],
        rhs_dilation=(dilation, dilation),
        dimension_numbers=("NCHW", "OIHW", "NCHW"))
    mean = conv.mean(axis=(0, 2, 3), keepdims=True)
    var = ((conv - mean) ** 2).mean(axis=(0, 2, 3), keepdims=True)
    y = (conv - mean) * jax.lax.rsqrt(var + eps) \
        * gamma.reshape(1, -1, 1, 1) + beta.reshape(1, -1, 1, 1)
    return jnp.maximum(y, 0.0)


if __name__ == "__main__":
    key = jax.random.PRNGKey(0)
    kx, kw = jax.random.split(key)

    # _ASPPModule(inplanes=4, planes=8, kernel_size=3, padding=2, dilation=2)
    N, Cin, H, W = 2, 4, 16, 16
    Cout, KH, KW = 8, 3, 3
    dilation, padding = 2, 2

    x = jax.random.normal(kx, (N, Cin, H, W), jnp.float32)

    # Deterministic kaiming_normal_ emulation: std = sqrt(2 / fan_in)
    fan_in = Cin * KH * KW
    weight = jax.random.normal(kw, (Cout, Cin, KH, KW), jnp.float32) * jnp.sqrt(2.0 / fan_in)
    gamma = jnp.ones((Cout,), jnp.float32)   # BN weight filled with 1
    beta = jnp.zeros((Cout,), jnp.float32)   # BN bias zeroed

    ref = _reference(x, weight, gamma, beta, padding, dilation)

    # Default fast path: bf16 conv intermediate (BN stats still from the f32 acc).
    out = aspp_forward(x, weight, gamma, beta, padding=padding, dilation=dilation)
    out = jax.block_until_ready(out)
    assert out.shape == (N, Cout, H, W)
    assert jnp.allclose(out, ref, atol=3e-2, rtol=3e-2), "bf16-path mismatch vs reference"

    # Tight-tolerance check: f32 intermediate, forced multi-H-tile grid so the
    # halo'd-band gather / tiled path is exercised too.
    out32 = aspp_forward(x, weight, gamma, beta, padding=padding, dilation=dilation,
                         conv_dtype=jnp.float32, max_m=64)
    out32 = jax.block_until_ready(out32)
    assert jnp.allclose(out32, ref, atol=2e-4, rtol=2e-4), "f32-path mismatch vs reference"

    print("KERNEL_OK")
</pallas_src>

<mosaic_0001>
module attributes {stable_mosaic.version = 11 : i64} {
  func.func @_conv_stats_kernel(%arg0: i32, %arg1: i32, %arg2: memref<1x1x20x20x128xf32, #tpu.memory_space<vmem>>, %arg3: memref<9x128x128xf32, #tpu.memory_space<vmem>>, %arg4: memref<1x16x16x128xbf16, #tpu.memory_space<vmem>>, %arg5: memref<1x1x2x128xf32, #tpu.memory_space<vmem>>) attributes {dimension_semantics = [#tpu.dimension_semantics<parallel>, #tpu.dimension_semantics<parallel>], iteration_bounds = array<i64: 2, 1>, scalar_prefetch = 0 : i64, scratch_operands = 0 : i64, tpu.core_type = #tpu.core_type<tc>, window_params = [{transform_indices = @transform_0, window_bounds = array<i64: 1, 1, 20, 20, 128>}, {pipeline_mode = #tpu.pipeline_mode<synchronous>, transform_indices = @transform_1, window_bounds = array<i64: 9, 128, 128>}, {transform_indices = @transform_2, window_bounds = array<i64: 1, 16, 16, 128>}, {transform_indices = @transform_3, window_bounds = array<i64: 1, 1, 2, 128>}]} {
    %c0 = arith.constant 0 : index
    %c0_0 = arith.constant 0 : index
    %c0_1 = arith.constant 0 : index
    %c0_2 = arith.constant 0 : index
    %c0_3 = arith.constant 0 : index
    %0 = vector.load %arg2[%c0, %c0_0, %c0_1, %c0_2, %c0_3] : memref<1x1x20x20x128xf32, #tpu.memory_space<vmem>>, vector<1x1x20x20x128xf32>
    %1 = vector.extract_strided_slice %0 {offsets = [0, 0, 0, 0, 0], sizes = [1, 1, 16, 16, 128], strides = [1, 1, 1, 1, 1]} : vector<1x1x20x20x128xf32> to vector<1x1x16x16x128xf32>
    %2 = vector.shape_cast %1 : vector<1x1x16x16x128xf32> to vector<16x16x128xf32>
    %3 = vector.shape_cast %2 : vector<16x16x128xf32> to vector<256x128xf32>
    %c0_4 = arith.constant 0 : index
    %c0_5 = arith.constant 0 : index
    %c0_6 = arith.constant 0 : index
    %4 = vector.load %arg3[%c0_4, %c0_5, %c0_6] : memref<9x128x128xf32, #tpu.memory_space<vmem>>, vector<1x128x128xf32>
    %5 = vector.shape_cast %4 : vector<1x128x128xf32> to vector<128x128xf32>
    %cst = arith.constant dense<0.000000e+00> : vector<256x128xf32>
    %6 = tpu.matmul %3, %5, %cst {dimension_numbers = #tpu.dot_dimension_numbers<[1], [0], [0], [1], [0, 0, 1, 1], [], []>} : vector<256x128xf32>, vector<128x128xf32>, vector<256x128xf32> -> vector<256x128xf32>
    %7 = vector.extract_strided_slice %0 {offsets = [0, 0, 0, 2, 0], sizes = [1, 1, 16, 16, 128], strides = [1, 1, 1, 1, 1]} : vector<1x1x20x20x128xf32> to vector<1x1x16x16x128xf32>
    %8 = vector.shape_cast %7 : vector<1x1x16x16x128xf32> to vector<16x16x128xf32>
    %9 = vector.shape_cast %8 : vector<16x16x128xf32> to vector<256x128xf32>
    %c1 = arith.constant 1 : index
    %c0_7 = arith.constant 0 : index
    %c0_8 = arith.constant 0 : index
    %10 = vector.load %arg3[%c1, %c0_7, %c0_8] : memref<9x128x128xf32, #tpu.memory_space<vmem>>, vector<1x128x128xf32>
    %11 = vector.shape_cast %10 : vector<1x128x128xf32> to vector<128x128xf32>
    %cst_9 = arith.constant dense<0.000000e+00> : vector<256x128xf32>
    %12 = tpu.matmul %9, %11, %cst_9 {dimension_numbers = #tpu.dot_dimension_numbers<[1], [0], [0], [1], [0, 0, 1, 1], [], []>} : vector<256x128xf32>, vector<128x128xf32>, vector<256x128xf32> -> vector<256x128xf32>
    %13 = arith.addf %6, %12 : vector<256x128xf32>
    %14 = vector.extract_strided_slice %0 {offsets = [0, 0, 0, 4, 0], sizes = [1, 1, 16, 16, 128], strides = [1, 1, 1, 1, 1]} : vector<1x1x20x20x128xf32> to vector<1x1x16x16x128xf32>
    %15 = vector.shape_cast %14 : vector<1x1x16x16x128xf32> to vector<16x16x128xf32>
    %16 = vector.shape_cast %15 : vector<16x16x128xf32> to vector<256x128xf32>
    %c2 = arith.constant 2 : index
    %c0_10 = arith.constant 0 : index
    %c0_11 = arith.constant 0 : index
    %17 = vector.load %arg3[%c2, %c0_10, %c0_11] : memref<9x128x128xf32, #tpu.memory_space<vmem>>, vector<1x128x128xf32>
    %18 = vector.shape_cast %17 : vector<1x128x128xf32> to vector<128x128xf32>
    %cst_12 = arith.constant dense<0.000000e+00> : vector<256x128xf32>
    %19 = tpu.matmul %16, %18, %cst_12 {dimension_numbers = #tpu.dot_dimension_numbers<[1], [0], [0], [1], [0, 0, 1, 1], [], []>} : vector<256x128xf32>, vector<128x128xf32>, vector<256x128xf32> -> vector<256x128xf32>
    %20 = arith.addf %13, %19 : vector<256x128xf32>
    %21 = vector.extract_strided_slice %0 {offsets = [0, 0, 2, 0, 0], sizes = [1, 1, 16, 16, 128], strides = [1, 1, 1, 1, 1]} : vector<1x1x20x20x128xf32> to vector<1x1x16x16x128xf32>
    %22 = vector.shape_cast %21 : vector<1x1x16x16x128xf32> to vector<16x16x128xf32>
    %23 = vector.shape_cast %22 : vector<16x16x128xf32> to vector<256x128xf32>
    %c3 = arith.constant 3 : index
    %c0_13 = arith.constant 0 : index
    %c0_14 = arith.constant 0 : index
    %24 = vector.load %arg3[%c3, %c0_13, %c0_14] : memref<9x128x128xf32, #tpu.memory_space<vmem>>, vector<1x128x128xf32>
    %25 = vector.shape_cast %24 : vector<1x128x128xf32> to vector<128x128xf32>
    %cst_15 = arith.constant dense<0.000000e+00> : vector<256x128xf32>
    %26 = tpu.matmul %23, %25, %cst_15 {dimension_numbers = #tpu.dot_dimension_numbers<[1], [0], [0], [1], [0, 0, 1, 1], [], []>} : vector<256x128xf32>, vector<128x128xf32>, vector<256x128xf32> -> vector<256x128xf32>
    %27 = arith.addf %20, %26 : vector<256x128xf32>
    %28 = vector.extract_strided_slice %0 {offsets = [0, 0, 2, 2, 0], sizes = [1, 1, 16, 16, 128], strides = [1, 1, 1, 1, 1]} : vector<1x1x20x20x128xf32> to vector<1x1x16x16x128xf32>
    %29 = vector.shape_cast %28 : vector<1x1x16x16x128xf32> to vector<16x16x128xf32>
    %30 = vector.shape_cast %29 : vector<16x16x128xf32> to vector<256x128xf32>
    %c4 = arith.constant 4 : index
    %c0_16 = arith.constant 0 : index
    %c0_17 = arith.constant 0 : index
    %31 = vector.load %arg3[%c4, %c0_16, %c0_17] : memref<9x128x128xf32, #tpu.memory_space<vmem>>, vector<1x128x128xf32>
    %32 = vector.shape_cast %31 : vector<1x128x128xf32> to vector<128x128xf32>
    %cst_18 = arith.constant dense<0.000000e+00> : vector<256x128xf32>
    %33 = tpu.matmul %30, %32, %cst_18 {dimension_numbers = #tpu.dot_dimension_numbers<[1], [0], [0], [1], [0, 0, 1, 1], [], []>} : vector<256x128xf32>, vector<128x128xf32>, vector<256x128xf32> -> vector<256x128xf32>
    %34 = arith.addf %27, %33 : vector<256x128xf32>
    %35 = vector.extract_strided_slice %0 {offsets = [0, 0, 2, 4, 0], sizes = [1, 1, 16, 16, 128], strides = [1, 1, 1, 1, 1]} : vector<1x1x20x20x128xf32> to vector<1x1x16x16x128xf32>
    %36 = vector.shape_cast %35 : vector<1x1x16x16x128xf32> to vector<16x16x128xf32>
    %37 = vector.shape_cast %36 : vector<16x16x128xf32> to vector<256x128xf32>
    %c5 = arith.constant 5 : index
    %c0_19 = arith.constant 0 : index
    %c0_20 = arith.constant 0 : index
    %38 = vector.load %arg3[%c5, %c0_19, %c0_20] : memref<9x128x128xf32, #tpu.memory_space<vmem>>, vector<1x128x128xf32>
    %39 = vector.shape_cast %38 : vector<1x128x128xf32> to vector<128x128xf32>
    %cst_21 = arith.constant dense<0.000000e+00> : vector<256x128xf32>
    %40 = tpu.matmul %37, %39, %cst_21 {dimension_numbers = #tpu.dot_dimension_numbers<[1], [0], [0], [1], [0, 0, 1, 1], [], []>} : vector<256x128xf32>, vector<128x128xf32>, vector<256x128xf32> -> vector<256x128xf32>
    %41 = arith.addf %34, %40 : vector<256x128xf32>
    %42 = vector.extract_strided_slice %0 {offsets = [0, 0, 4, 0, 0], sizes = [1, 1, 16, 16, 128], strides = [1, 1, 1, 1, 1]} : vector<1x1x20x20x128xf32> to vector<1x1x16x16x128xf32>
    %43 = vector.shape_cast %42 : vector<1x1x16x16x128xf32> to vector<16x16x128xf32>
    %44 = vector.shape_cast %43 : vector<16x16x128xf32> to vector<256x128xf32>
    %c6 = arith.constant 6 : index
    %c0_22 = arith.constant 0 : index
    %c0_23 = arith.constant 0 : index
    %45 = vector.load %arg3[%c6, %c0_22, %c0_23] : memref<9x128x128xf32, #tpu.memory_space<vmem>>, vector<1x128x128xf32>
    %46 = vector.shape_cast %45 : vector<1x128x128xf32> to vector<128x128xf32>
    %cst_24 = arith.constant dense<0.000000e+00> : vector<256x128xf32>
    %47 = tpu.matmul %44, %46, %cst_24 {dimension_numbers = #tpu.dot_dimension_numbers<[1], [0], [0], [1], [0, 0, 1, 1], [], []>} : vector<256x128xf32>, vector<128x128xf32>, vector<256x128xf32> -> vector<256x128xf32>
    %48 = arith.addf %41, %47 : vector<256x128xf32>
    %49 = vector.extract_strided_slice %0 {offsets = [0, 0, 4, 2, 0], sizes = [1, 1, 16, 16, 128], strides = [1, 1, 1, 1, 1]} : vector<1x1x20x20x128xf32> to vector<1x1x16x16x128xf32>
    %50 = vector.shape_cast %49 : vector<1x1x16x16x128xf32> to vector<16x16x128xf32>
    %51 = vector.shape_cast %50 : vector<16x16x128xf32> to vector<256x128xf32>
    %c7 = arith.constant 7 : index
    %c0_25 = arith.constant 0 : index
    %c0_26 = arith.constant 0 : index
    %52 = vector.load %arg3[%c7, %c0_25, %c0_26] : memref<9x128x128xf32, #tpu.memory_space<vmem>>, vector<1x128x128xf32>
    %53 = vector.shape_cast %52 : vector<1x128x128xf32> to vector<128x128xf32>
    %cst_27 = arith.constant dense<0.000000e+00> : vector<256x128xf32>
    %54 = tpu.matmul %51, %53, %cst_27 {dimension_numbers = #tpu.dot_dimension_numbers<[1], [0], [0], [1], [0, 0, 1, 1], [], []>} : vector<256x128xf32>, vector<128x128xf32>, vector<256x128xf32> -> vector<256x128xf32>
    %55 = arith.addf %48, %54 : vector<256x128xf32>
    %56 = vector.extract_strided_slice %0 {offsets = [0, 0, 4, 4, 0], sizes = [1, 1, 16, 16, 128], strides = [1, 1, 1, 1, 1]} : vector<1x1x20x20x128xf32> to vector<1x1x16x16x128xf32>
    %57 = vector.shape_cast %56 : vector<1x1x16x16x128xf32> to vector<16x16x128xf32>
    %58 = vector.shape_cast %57 : vector<16x16x128xf32> to vector<256x128xf32>
    %c8 = arith.constant 8 : index
    %c0_28 = arith.constant 0 : index
    %c0_29 = arith.constant 0 : index
    %59 = vector.load %arg3[%c8, %c0_28, %c0_29] : memref<9x128x128xf32, #tpu.memory_space<vmem>>, vector<1x128x128xf32>
    %60 = vector.shape_cast %59 : vector<1x128x128xf32> to vector<128x128xf32>
    %cst_30 = arith.constant dense<0.000000e+00> : vector<256x128xf32>
    %61 = tpu.matmul %58, %60, %cst_30 {dimension_numbers = #tpu.dot_dimension_numbers<[1], [0], [0], [1], [0, 0, 1, 1], [], []>} : vector<256x128xf32>, vector<128x128xf32>, vector<256x128xf32> -> vector<256x128xf32>
    %62 = arith.addf %55, %61 : vector<256x128xf32>
    %63 = vector.shape_cast %62 : vector<256x128xf32> to vector<1x16x16x128xf32>
    %64 = arith.truncf %63 : vector<1x16x16x128xf32> to vector<1x16x16x128xbf16>
    %c0_31 = arith.constant 0 : index
    %c0_32 = arith.constant 0 : index
    %c0_33 = arith.constant 0 : index
    %c0_34 = arith.constant 0 : index
    %65 = vector.load %arg4[%c0_31, %c0_32, %c0_33, %c0_34] : memref<1x16x16x128xbf16, #tpu.memory_space<vmem>>, vector<1x16x16x128xbf16>
    tpu.vector_store %arg4[%c0_31, %c0_32, %c0_33, %c0_34], %64 {strides = array<i32>} : memref<1x16x16x128xbf16, #tpu.memory_space<vmem>>, vector<1x16x16x128xbf16>,
    %cst_35 = arith.constant dense<0.000000e+00> : vector<128xf32>
    %66 = vector.multi_reduction <add>, %62, %cst_35 [0] : vector<256x128xf32> to vector<128xf32>
    %67 = vector.shape_cast %66 : vector<128xf32> to vector<1x128xf32>
    %68 = arith.mulf %62, %62 : vector<256x128xf32>
    %cst_36 = arith.constant dense<0.000000e+00> : vector<128xf32>
    %69 = vector.multi_reduction <add>, %68, %cst_36 [0] : vector<256x128xf32> to vector<128xf32>
    %70 = vector.shape_cast %69 : vector<128xf32> to vector<1x128xf32>
    %71 = tpu.concatenate %67, %70 in 0 : vector<1x128xf32>, vector<1x128xf32> -> vector<2x128xf32>
    %72 = vector.shape_cast %71 : vector<2x128xf32> to vector<1x1x2x128xf32>
    %c0_37 = arith.constant 0 : index
    %c0_38 = arith.constant 0 : index
    %c0_39 = arith.constant 0 : index
    %c0_40 = arith.constant 0 : index
    %73 = vector.load %arg5[%c0_37, %c0_38, %c0_39, %c0_40] : memref<1x1x2x128xf32, #tpu.memory_space<vmem>>, vector<1x1x2x128xf32>
    tpu.vector_store %arg5[%c0_37, %c0_38, %c0_39, %c0_40], %72 {strides = array<i32>} : memref<1x1x2x128xf32, #tpu.memory_space<vmem>>, vector<1x1x2x128xf32>,
    return
  }
  func.func @transform_0(%arg0: i32, %arg1: i32) -> (i32, i32, i32, i32, i32) {
    %c0_i32 = arith.constant 0 : i32
    %c0_i32_0 = arith.constant 0 : i32
    %c0_i32_1 = arith.constant 0 : i32
    %c0_i32_2 = arith.constant 0 : i32
    return %arg0, %arg1, %c0_i32, %c0_i32_0, %c0_i32_1 : i32, i32, i32, i32, i32
  }
  func.func @transform_1(%arg0: i32, %arg1: i32) -> (i32, i32, i32) {
    %c0_i32 = arith.constant 0 : i32
    %c0_i32_0 = arith.constant 0 : i32
    %c0_i32_1 = arith.constant 0 : i32
    %c0_i32_2 = arith.constant 0 : i32
    return %c0_i32, %c0_i32_0, %c0_i32_1 : i32, i32, i32
  }
  func.func @transform_2(%arg0: i32, %arg1: i32) -> (i32, i32, i32, i32) {
    %c0_i32 = arith.constant 0 : i32
    %c0_i32_0 = arith.constant 0 : i32
    %c0_i32_1 = arith.constant 0 : i32
    return %arg0, %arg1, %c0_i32, %c0_i32_0 : i32, i32, i32, i32
  }
  func.func @transform_3(%arg0: i32, %arg1: i32) -> (i32, i32, i32, i32) {
    %c0_i32 = arith.constant 0 : i32
    %c0_i32_0 = arith.constant 0 : i32
    %c0_i32_1 = arith.constant 0 : i32
    return %arg0, %arg1, %c0_i32, %c0_i32_0 : i32, i32, i32, i32
  }
}

</mosaic_0001>

<llo_original>
// kernel: tpu_custom_call.1
$region0: #{tpu_custom_call.1}
  #allocation0 [shape = 'u32[]', space=smem, size = 0x4, offset = 0x4, fixed_abs, tag = 'smem constant byte address 0x4 - core index']
  #allocation1 [shape = 'u32[72,128]{1,0:T(1,128)}', space=vmem, size = 0x9000, scoped, tag = 'internal scratch']
  %s0 = inlined_call_operand.vmem [shape: f32[2,1,20,20,128], index: 0, kind: input, shape index: {}]
  %s1 = inlined_call_operand.vmem [shape: f32[9,128,128], index: 1, kind: input, shape index: {}]
  %s2 = inlined_call_operand.hbm [shape: bf16[2,16,16,128], index: 2, kind: output, shape index: {0}]
  %s3 = inlined_call_operand.hbm [shape: f32[2,1,2,128], index: 3, kind: output, shape index: {1}]
  %4 = xla_tuple %s2, %s3
  %s5 = sld [smem:[#allocation0]]
  $region49: #{tpu_custom_call.1} parent=0
    _
  %s7 = ssub.s32 1, %s5
  %s8 = scalar_select 0, %s7, %s5
  $region1: #{tpu_custom_call.1} parent=0
    #allocation2 [shape = 'u8[131072]{0}', space=vmem, size = 0x20000, scoped, tag = 'output window, operand 0']
    #allocation3 [shape = 's32[2]{0}', space=sflag, size = 0x8, scoped, tag = 'scoped memory for tpu_custom_call.1']
    #allocation4 [shape = 'u8[2048]{0}', space=vmem, size = 0x800, scoped, tag = 'output window, operand 1']
    #allocation5 [shape = 's32[2]{0}', space=sflag, size = 0x8, scoped, tag = 'scoped memory for tpu_custom_call.1']
    %9 = vsyncpa [#allocation3], 0
    %s10 = scalar_lea.sflag [#allocation3], 1
    %11 = vsyncpa %s10, 0
    %12 = vsyncpa [#allocation5], 0
    %s13 = scalar_lea.sflag [#allocation5], 1
    %14 = vsyncpa %s13, 0
    loop: start=0, step=1, limit=4
    $region2: #{tpu_custom_call.1} parent=1 // loop_pre_header
      _
    $region3: #{tpu_custom_call.1} parent=1 // loop_header
      %s16 = sphi 0, %s20
      %p17 = scmp.ge.s32.totalorder %s16, 4
      %s23 = sphi 0, %s35
      %s24 = sphi 0, %s31
      %s25 = sphi 0, %s23
      %s26 = sphi 0, %s24
      %s27 = sphi 0, %s25
      %s28 = sphi 0, %s26
      %s40 = sphi 0, %s42
      %s43 = sphi 0, %s40
      %s44 = sphi 0, %s43
      %s60 = sphi 0, %s44
      %s64 = sphi 0, %s64
      %s66 = sphi 0, %s64
      %s67 = sphi 0, %s66
      %s81 = sphi 0, %s67
      %s89 = sphi 0, %s91
      %s92 = sphi 0, %s89
      %s93 = sphi 0, %s92
      %s109 = sphi 0, %s93
      %s117 = sphi 0, %s119
      %s120 = sphi 0, %s117
      %s121 = sphi 0, %s120
      %s137 = sphi 0, %s121
    $region4: #{tpu_custom_call.1} parent=1 // loop_header_branch
      %19 = sbr.rel (%p17) target = $region8
    $region5: #{tpu_custom_call.1} parent=1 // loop_body
      %s21 = ssub.s32 %s16, 1
      %s22 = ssub.s32 %s16, 2
      %s29 = sadd.s32 1, %s24
      %p30 = scmp.ge.s32.totalorder %s29, 1
      %s31 = scalar_select %p30, 0, %s29
      %s32 = sadd.s32 1, %s23
      %s33 = scalar_select %p30, %s32, %s23
      %p34 = scmp.ge.s32.totalorder %s33, 2
      %s35 = scalar_select %p34, 0, %s33
      %s36 = ssub.s32 %s23, %s35
      %s37 = ssub.s32 %s24, %s31
      %s38 = sor.u32 %s36, %s37
      %p39 = scmp.eq.s32.totalorder %s38, 0
      %s41 = sadd.s32 %s40, 1
      %s42 = scalar_select %p39, %s40, %s41
      %p45 = pneg %p39
      %p46 = scmp.eq.s32.totalorder %s16, 1
      %p47 = por %p45, %p46
      %p48 = scmp.ne.s32.totalorder %s40, %s43
      %p49 = scmp.eq.s32.totalorder %s16, 0
      %p50 = por %p48, %p49
      %p51 = scmp.ne.s32.totalorder %s40, %s43
      %p52 = scmp.eq.s32.totalorder %s21, 1
      %p53 = por %p51, %p52
      %p54 = scmp.ne.s32.totalorder %s43, %s44
      %p55 = scmp.eq.s32.totalorder %s21, 0
      %p56 = por %p54, %p55
      %p57 = scmp.ne.s32.totalorder %s43, %s44
      %p58 = scmp.eq.s32.totalorder %s22, 1
      %p59 = por %p57, %p58
      %p61 = scmp.ne.s32.totalorder %s44, %s60
      %p62 = scmp.eq.s32.totalorder %s22, 0
      %p63 = por %p61, %p62
      %s65 = sadd.s32 %s64, 1
      %p68 = scmp.eq.s32.totalorder %s16, 1
      %p69 = scmp.ne.s32.totalorder %s64, %s66
      %p70 = scmp.eq.s32.totalorder %s16, 0
      %p71 = por %p69, %p70
      %p72 = scmp.ne.s32.totalorder %s64, %s66
      %p73 = scmp.eq.s32.totalorder %s21, 1
      %p74 = por %p72, %p73
      %p75 = scmp.ne.s32.totalorder %s66, %s67
      %p76 = scmp.eq.s32.totalorder %s21, 0
      %p77 = por %p75, %p76
      %p78 = scmp.ne.s32.totalorder %s66, %s67
      %p79 = scmp.eq.s32.totalorder %s22, 1
      %p80 = por %p78, %p79
      %p82 = scmp.ne.s32.totalorder %s67, %s81
      %p83 = scmp.eq.s32.totalorder %s22, 0
      %p84 = por %p82, %p83
      %s85 = ssub.s32 %s23, %s35
      %s86 = ssub.s32 %s24, %s31
      %s87 = sor.u32 %s85, %s86
      %p88 = scmp.eq.s32.totalorder %s87, 0
      %s90 = sadd.s32 %s89, 1
      %s91 = scalar_select %p88, %s89, %s90
      %p94 = pneg %p88
      %p95 = scmp.eq.s32.totalorder %s16, 1
      %p96 = por %p94, %p95
      %p97 = scmp.ne.s32.totalorder %s89, %s92
      %p98 = scmp.eq.s32.totalorder %s16, 0
      %p99 = por %p97, %p98
      %p100 = scmp.ne.s32.totalorder %s89, %s92
      %p101 = scmp.eq.s32.totalorder %s21, 1
      %p102 = por %p100, %p101
      %p103 = scmp.ne.s32.totalorder %s92, %s93
      %p104 = scmp.eq.s32.totalorder %s21, 0
      %p105 = por %p103, %p104
      %p106 = scmp.ne.s32.totalorder %s92, %s93
      %p107 = scmp.eq.s32.totalorder %s22, 1
      %p108 = por %p106, %p107
      %p110 = scmp.ne.s32.totalorder %s93, %s109
      %p111 = scmp.eq.s32.totalorder %s22, 0
      %p112 = por %p110, %p111
      %s113 = ssub.s32 %s23, %s35
      %s114 = ssub.s32 %s24, %s31
      %s115 = sor.u32 %s113, %s114
      %p116 = scmp.eq.s32.totalorder %s115, 0
      %s118 = sadd.s32 %s117, 1
      %s119 = scalar_select %p116, %s117, %s118
      %p122 = pneg %p116
      %p123 = scmp.eq.s32.totalorder %s16, 1
      %p124 = por %p122, %p123
      %p125 = scmp.ne.s32.totalorder %s117, %s120
      %p126 = scmp.eq.s32.totalorder %s16, 0
      %p127 = por %p125, %p126
      %p128 = scmp.ne.s32.totalorder %s117, %s120
      %p129 = scmp.eq.s32.totalorder %s21, 1
      %p130 = por %p128, %p129
      %p131 = scmp.ne.s32.totalorder %s120, %s121
      %p132 = scmp.eq.s32.totalorder %s21, 0
      %p133 = por %p131, %p132
      %p134 = scmp.ne.s32.totalorder %s120, %s121
      %p135 = scmp.eq.s32.totalorder %s22, 1
      %p136 = por %p134, %p135
      %p138 = scmp.ne.s32.totalorder %s121, %s137
      %p139 = scmp.eq.s32.totalorder %s22, 0
      %p140 = por %p138, %p139
      %p141 = scmp.le.s32.totalorder 1, %s16
      %p142 = scmp.lt.s32.totalorder %s16, 3
      %p143 = pnand %p141, %p142
      %p144 = pneg %p143
      // Predicated region
      $region9: #{tpu_custom_call.1} parent=5 // pred_check
        _
      $region10: #{tpu_custom_call.1} parent=5 // pred_check_branch
        %146 = sbr.rel (%p143) target = $region12
      $region11: #{tpu_custom_call.1} parent=5 // pred_region
        %s147 = ssub.s32 %s16, 1
        // Predicated region
        $region13: #{tpu_custom_call.1} parent=11 // pred_check
          %p148 = pneg %p77
        $region14: #{tpu_custom_call.1} parent=11 // pred_check_branch
          %150 = sbr.rel (%p148) target = $region16
        $region15: #{tpu_custom_call.1} parent=11 // pred_region
          _
        $region16: #{tpu_custom_call.1} parent=11 // pred_fallthru
          _
      $region12: #{tpu_custom_call.1} parent=5 // pred_fallthru
        _
      %p151 = scmp.lt.s32.totalorder %s16, 2
      // Predicated region
      $region17: #{tpu_custom_call.1} parent=5 // pred_check
        %p152 = pneg %p151
      $region18: #{tpu_custom_call.1} parent=5 // pred_check_branch
        %154 = sbr.rel (%p152) target = $region20
      $region19: #{tpu_custom_call.1} parent=5 // pred_region
        // Predicated region
        $region21: #{tpu_custom_call.1} parent=19 // pred_check
          %p155 = pneg %p50
        $region22: #{tpu_custom_call.1} parent=19 // pred_check_branch
          %157 = sbr.rel (%p155) target = $region24
        $region23: #{tpu_custom_call.1} parent=19 // pred_region
          %p158 = scmp.lt.s32.totalorder %s23, 1
          %s159 = scalar_select %p158, %s23, 1
          %p160 = scmp.lt.s32.totalorder %s24, 0
          %s161 = scalar_select %p160, %s24, 0
          %s162 = smul.addr %s161, 60
          %s163 = smul.addr %s159, 60
          %s164 = sadd.s32 %s162, %s163
          %s165 = smul.addr %s164, 8
          %s166 = scalar_lea.vmem %s0, %s165
        $region24: #{tpu_custom_call.1} parent=19 // pred_fallthru
          _
      $region20: #{tpu_custom_call.1} parent=5 // pred_fallthru
        _
      %p167 = scmp.le.s32.totalorder 1, %s16
      %p168 = scmp.lt.s32.totalorder %s16, 3
      %p169 = pnand %p167, %p168
      %p170 = pneg %p169
      // Predicated region
      $region25: #{tpu_custom_call.1} parent=5 // pred_check
        _
      $region26: #{tpu_custom_call.1} parent=5 // pred_check_branch
        %172 = sbr.rel (%p169) target = $region28
      $region27: #{tpu_custom_call.1} parent=5 // pred_region
        %s173 = ssub.s32 %s16, 1
        %p174 = scmp.lt.s32.totalorder %s25, 1
        %s175 = scalar_select %p174, %s25, 1
        %p176 = scmp.lt.s32.totalorder %s26, 0
        %s177 = scalar_select %p176, %s26, 0
        %s178 = smul.addr %s177, 60
        %s179 = smul.addr %s175, 60
        %s180 = sadd.s32 %s178, %s179
        %s181 = smul.addr %s180, 8
        %s182 = scalar_lea.vmem %s0, %s181
        %p183 = pneg %p56
        %p184 = pneg %p53
        %p185 = pneg %p77
        %p186 = pneg %p74
        %p187 = pneg %p105
        %p188 = pneg %p102
        %s189 = sand.u32 %s92, 1
        %s190 = scalar_lea.sflag [#allocation3], %s189
        %s191 = sand.u32 %s92, 1
        %s192 = smul.addr %s191, 128
        %s193 = scalar_lea.vmem [#allocation2], %s192
        %p194 = pneg %p133
        %p195 = pneg %p130
        %s196 = sand.u32 %s120, 1
        %s197 = scalar_lea.sflag [#allocation5], %s196
        %s198 = sand.u32 %s120, 1
        %s199 = smul.addr %s198, 2
        %s200 = scalar_lea.vmem [#allocation4], %s199
        %p201 = scmp.lt.s32.totalorder %s25, 1
        %s202 = scalar_select %p201, %s25, 1
        %p203 = scmp.lt.s32.totalorder %s26, 0
        %s204 = scalar_select %p203, %s26, 0
        %s205 = smul.addr %s204, 60
        %s206 = smul.addr %s202, 60
        %s207 = sadd.s32 %s205, %s206
        %s208 = smul.addr %s207, 8
        %s209 = scalar_lea.vmem %s0, %s208
        %s210 = smul.u32 16, %s26
        %v211 = vld [vmem:[%s209] sm:$0xff]
        %v212 = vld [vmem:[%s209 + $0x8] sm:$0xff]
        %v213 = vld [vmem:[%s209 + $0x10] sm:$0xf]
        %v214 = vld [vmem:[%s209 + $0x18] sm:$0xff]
        %v215 = vld [vmem:[%s209 + $0x20] sm:$0xff]
        %v216 = vld [vmem:[%s209 + $0x28] sm:$0xf]
        %v217 = vld [vmem:[%s209 + $0x30] sm:$0xff]
        %v218 = vld [vmem:[%s209 + $0x38] sm:$0xff]
        %v219 = vld [vmem:[%s209 + $0x40] sm:$0xf]
        %v220 = vld [vmem:[%s209 + $0x48] sm:$0xff]
        %v221 = vld [vmem:[%s209 + $0x50] sm:$0xff]
        %v222 = vld [vmem:[%s209 + $0x58] sm:$0xf]
        %v223 = vld [vmem:[%s209 + $0x60] sm:$0xff]
        %v224 = vld [vmem:[%s209 + $0x68] sm:$0xff]
        %v225 = vld [vmem:[%s209 + $0x70] sm:$0xf]
        %v226 = vld [vmem:[%s209 + $0x78] sm:$0xff]
        %v227 = vld [vmem:[%s209 + $0x80] sm:$0xff]
        %v228 = vld [vmem:[%s209 + $0x88] sm:$0xf]
        %v229 = vld [vmem:[%s209 + $0x90] sm:$0xff]
        %v230 = vld [vmem:[%s209 + $0x98] sm:$0xff]
        %v231 = vld [vmem:[%s209 + $0xa0] sm:$0xf]
        %v232 = vld [vmem:[%s209 + $0xa8] sm:$0xff]
        %v233 = vld [vmem:[%s209 + $0xb0] sm:$0xff]
        %v234 = vld [vmem:[%s209 + $0xb8] sm:$0xf]
        %v235 = vld [vmem:[%s209 + $0xc0] sm:$0xff]
        %v236 = vld [vmem:[%s209 + $0xc8] sm:$0xff]
        %v237 = vld [vmem:[%s209 + $0xd0] sm:$0xf]
        %v238 = vld [vmem:[%s209 + $0xd8] sm:$0xff]
        %v239 = vld [vmem:[%s209 + $0xe0] sm:$0xff]
        %v240 = vld [vmem:[%s209 + $0xe8] sm:$0xf]
        %v241 = vld [vmem:[%s209 + $0xf0] sm:$0xff]
        %v242 = vld [vmem:[%s209 + $0xf8] sm:$0xff]
        %v243 = vld [vmem:[%s209 + $0x100] sm:$0xf]
        %v244 = vld [vmem:[%s209 + $0x108] sm:$0xff]
        %v245 = vld [vmem:[%s209 + $0x110] sm:$0xff]
        %v246 = vld [vmem:[%s209 + $0x118] sm:$0xf]
        %v247 = vld [vmem:[%s209 + $0x120] sm:$0xff]
        %v248 = vld [vmem:[%s209 + $0x128] sm:$0xff]
        %v249 = vld [vmem:[%s209 + $0x130] sm:$0xf]
        %v250 = vld [vmem:[%s209 + $0x138] sm:$0xff]
        %v251 = vld [vmem:[%s209 + $0x140] sm:$0xff]
        %v252 = vld [vmem:[%s209 + $0x148] sm:$0xf]
        %v253 = vld [vmem:[%s209 + $0x150] sm:$0xff]
        %v254 = vld [vmem:[%s209 + $0x158] sm:$0xff]
        %v255 = vld [vmem:[%s209 + $0x160] sm:$0xf]
        %v256 = vld [vmem:[%s209 + $0x168] sm:$0xff]
        %v257 = vld [vmem:[%s209 + $0x170] sm:$0xff]
        %v258 = vld [vmem:[%s209 + $0x178] sm:$0xf]
        %v259 = vld [vmem:[%s209 + $0x180] sm:$0xff]
        %v260 = vld [vmem:[%s209 + $0x188] sm:$0xff]
        %v261 = vld [vmem:[%s209 + $0x190] sm:$0xf]
        %v262 = vld [vmem:[%s209 + $0x198] sm:$0xff]
        %v263 = vld [vmem:[%s209 + $0x1a0] sm:$0xff]
        %v264 = vld [vmem:[%s209 + $0x1a8] sm:$0xf]
        %v265 = vld [vmem:[%s209 + $0x1b0] sm:$0xff]
        %v266 = vld [vmem:[%s209 + $0x1b8] sm:$0xff]
        %v267 = vld [vmem:[%s209 + $0x1c0] sm:$0xf]
        %v268 = vld [vmem:[%s209 + $0x1c8] sm:$0xff]
        %v269 = vld [vmem:[%s209 + $0x1d0] sm:$0xff]
        %v270 = vld [vmem:[%s209 + $0x1d8] sm:$0xf]
        %v271 = vld [vmem:[%s1] sm:$0xff]
        %v272 = vld [vmem:[%s1 + $0x8] sm:$0xff]
        %v273 = vld [vmem:[%s1 + $0x10] sm:$0xff]
        %v274 = vld [vmem:[%s1 + $0x18] sm:$0xff]
        %v275 = vld [vmem:[%s1 + $0x20] sm:$0xff]
        %v276 = vld [vmem:[%s1 + $0x28] sm:$0xff]
        %v277 = vld [vmem:[%s1 + $0x30] sm:$0xff]
        %v278 = vld [vmem:[%s1 + $0x38] sm:$0xff]
        %v279 = vld [vmem:[%s1 + $0x40] sm:$0xff]
        %v280 = vld [vmem:[%s1 + $0x48] sm:$0xff]
        %v281 = vld [vmem:[%s1 + $0x50] sm:$0xff]
        %v282 = vld [vmem:[%s1 + $0x58] sm:$0xff]
        %v283 = vld [vmem:[%s1 + $0x60] sm:$0xff]
        %v284 = vld [vmem:[%s1 + $0x68] sm:$0xff]
        %v285 = vld [vmem:[%s1 + $0x70] sm:$0xff]
        %v286 = vld [vmem:[%s1 + $0x78] sm:$0xff]
        %vm335 = vcmask 1045504
        %v336 = vrot.slane %v211, 2
        %v337 = vrot.slane %v212, 2
        %v338 = vsel %vm335, %v336, %v337
        %v339 = vrot.slane %v213, 2
        %v340 = vsel %vm335, %v337, %v339
        %v341 = vrot.slane %v214, 2
        %v342 = vrot.slane %v215, 2
        %v343 = vsel %vm335, %v341, %v342
        %v344 = vrot.slane %v216, 2
        %v345 = vsel %vm335, %v342, %v344
        %v346 = vrot.slane %v217, 2
        %v347 = vrot.slane %v218, 2
        %v348 = vsel %vm335, %v346, %v347
        %v349 = vrot.slane %v219, 2
        %v350 = vsel %vm335, %v347, %v349
        %v351 = vrot.slane %v220, 2
        %v352 = vrot.slane %v221, 2
        %v353 = vsel %vm335, %v351, %v352
        %v354 = vrot.slane %v222, 2
        %v355 = vsel %vm335, %v352, %v354
        %v356 = vrot.slane %v223, 2
        %v357 = vrot.slane %v224, 2
        %v358 = vsel %vm335, %v356, %v357
        %v359 = vrot.slane %v225, 2
        %v360 = vsel %vm335, %v357, %v359
        %v361 = vrot.slane %v226, 2
        %v362 = vrot.slane %v227, 2
        %v363 = vsel %vm335, %v361, %v362
        %v364 = vrot.slane %v228, 2
        %v365 = vsel %vm335, %v362, %v364
        %v366 = vrot.slane %v229, 2
        %v367 = vrot.slane %v230, 2
        %v368 = vsel %vm335, %v366, %v367
        %v369 = vrot.slane %v231, 2
        %v370 = vsel %vm335, %v367, %v369
        %v371 = vrot.slane %v232, 2
        %v372 = vrot.slane %v233, 2
        %v373 = vsel %vm335, %v371, %v372
        %v374 = vrot.slane %v234, 2
        %v375 = vsel %vm335, %v372, %v374
        %v376 = vrot.slane %v235, 2
        %v377 = vrot.slane %v236, 2
        %v378 = vsel %vm335, %v376, %v377
        %v379 = vrot.slane %v237, 2
        %v380 = vsel %vm335, %v377, %v379
        %v381 = vrot.slane %v238, 2
        %v382 = vrot.slane %v239, 2
        %v383 = vsel %vm335, %v381, %v382
        %v384 = vrot.slane %v240, 2
        %v385 = vsel %vm335, %v382, %v384
        %v386 = vrot.slane %v241, 2
        %v387 = vrot.slane %v242, 2
        %v388 = vsel %vm335, %v386, %v387
        %v389 = vrot.slane %v243, 2
        %v390 = vsel %vm335, %v387, %v389
        %v391 = vrot.slane %v244, 2
        %v392 = vrot.slane %v245, 2
        %v393 = vsel %vm335, %v391, %v392
        %v394 = vrot.slane %v246, 2
        %v395 = vsel %vm335, %v392, %v394
        %v396 = vrot.slane %v247, 2
        %v397 = vrot.slane %v248, 2
        %v398 = vsel %vm335, %v396, %v397
        %v399 = vrot.slane %v249, 2
        %v400 = vsel %vm335, %v397, %v399
        %v401 = vrot.slane %v250, 2
        %v402 = vrot.slane %v251, 2
        %v403 = vsel %vm335, %v401, %v402
        %v404 = vrot.slane %v252, 2
        %v405 = vsel %vm335, %v402, %v404
        %v406 = vrot.slane %v253, 2
        %v407 = vrot.slane %v254, 2
        %v408 = vsel %vm335, %v406, %v407
        %v409 = vrot.slane %v255, 2
        %v410 = vsel %vm335, %v407, %v409
        %v411 = vrot.slane %v256, 2
        %v412 = vrot.slane %v257, 2
        %v413 = vsel %vm335, %v411, %v412
        %v414 = vrot.slane %v258, 2
        %v415 = vsel %vm335, %v412, %v414
        %s448 = scalar_lea.vmem %s1, 128
        %v449 = vld [vmem:[%s448] sm:$0xff]
        %v450 = vld [vmem:[%s448 + $0x8] sm:$0xff]
        %v451 = vld [vmem:[%s448 + $0x10] sm:$0xff]
        %v452 = vld [vmem:[%s448 + $0x18] sm:$0xff]
        %v453 = vld [vmem:[%s448 + $0x20] sm:$0xff]
        %v454 = vld [vmem:[%s448 + $0x28] sm:$0xff]
        %v455 = vld [vmem:[%s448 + $0x30] sm:$0xff]
        %v456 = vld [vmem:[%s448 + $0x38] sm:$0xff]
        %v457 = vld [vmem:[%s448 + $0x40] sm:$0xff]
        %v458 = vld [vmem:[%s448 + $0x48] sm:$0xff]
        %v459 = vld [vmem:[%s448 + $0x50] sm:$0xff]
        %v460 = vld [vmem:[%s448 + $0x58] sm:$0xff]
        %v461 = vld [vmem:[%s448 + $0x60] sm:$0xff]
        %v462 = vld [vmem:[%s448 + $0x68] sm:$0xff]
        %v463 = vld [vmem:[%s448 + $0x70] sm:$0xff]
        %v464 = vld [vmem:[%s448 + $0x78] sm:$0xff]
        %465 = vmatpush.msra.mxu0 %v464
        %466 = vmatpush.msra.mxu0 %v463
        %467 = vmatpush.msra.mxu0 %v462
        %468 = vmatpush.msra.mxu0 %v461
        %469 = vmatpush.msra.mxu0 %v460
        %470 = vmatpush.msra.mxu0 %v459
        %471 = vmatpush.msra.mxu0 %v458
        %472 = vmatpush.msra.mxu0 %v457
        %473 = vmatpush.msra.mxu0 %v456
        %474 = vmatpush.msra.mxu0 %v455
        %475 = vmatpush.msra.mxu0 %v454
        %476 = vmatpush.msra.mxu0 %v453
        %477 = vmatpush.msra.mxu0 %v452
        %478 = vmatpush.msra.mxu0 %v451
        %479 = vmatpush.msra.mxu0 %v450
        %480 = vmatpush.msra.mxu0 %v449
        %481 = vmatmul.f32.gmra.mxu0 %v338
        %v482 = vpop.f32.mrf.mxu0
        %v483 = vadd.f32 0.0, %v482
        %484 = vmatmul.f32.gmra.mxu0 %v340
        %v485 = vpop.f32.mrf.mxu0
        %v486 = vadd.f32 0.0, %v485
        %487 = vmatmul.f32.gmra.mxu0 %v343
        %v488 = vpop.f32.mrf.mxu0
        %v489 = vadd.f32 0.0, %v488
        %490 = vmatmul.f32.gmra.mxu0 %v345
        %v491 = vpop.f32.mrf.mxu0
        %v492 = vadd.f32 0.0, %v491
        %493 = vmatmul.f32.gmra.mxu0 %v348
        %v494 = vpop.f32.mrf.mxu0
        %v495 = vadd.f32 0.0, %v494
        %496 = vmatmul.f32.gmra.mxu0 %v350
        %v497 = vpop.f32.mrf.mxu0
        %v498 = vadd.f32 0.0, %v497
        %499 = vmatmul.f32.gmra.mxu0 %v353
        %v500 = vpop.f32.mrf.mxu0
        %v501 = vadd.f32 0.0, %v500
        %502 = vmatmul.f32.gmra.mxu0 %v355
        %v503 = vpop.f32.mrf.mxu0
        %v504 = vadd.f32 0.0, %v503
        %505 = vmatmul.f32.gmra.mxu0 %v358
        %v506 = vpop.f32.mrf.mxu0
        %v507 = vadd.f32 0.0, %v506
        %508 = vmatmul.f32.gmra.mxu0 %v360
        %v509 = vpop.f32.mrf.mxu0
        %v510 = vadd.f32 0.0, %v509
        %511 = vmatmul.f32.gmra.mxu0 %v363
        %v512 = vpop.f32.mrf.mxu0
        %v513 = vadd.f32 0.0, %v512
        %514 = vmatmul.f32.gmra.mxu0 %v365
        %v515 = vpop.f32.mrf.mxu0
        %v516 = vadd.f32 0.0, %v515
        %517 = vmatmul.f32.gmra.mxu0 %v368
        %v518 = vpop.f32.mrf.mxu0
        %v519 = vadd.f32 0.0, %v518
        %520 = vmatmul.f32.gmra.mxu0 %v370
        %v521 = vpop.f32.mrf.mxu0
        %v522 = vadd.f32 0.0, %v521
        %523 = vmatmul.f32.gmra.mxu0 %v373
        %v524 = vpop.f32.mrf.mxu0
        %v525 = vadd.f32 0.0, %v524
        %526 = vmatmul.f32.gmra.mxu0 %v375
        %v527 = vpop.f32.mrf.mxu0
        %v528 = vadd.f32 0.0, %v527
        %529 = vmatmul.f32.gmra.mxu0 %v378
        %v530 = vpop.f32.mrf.mxu0
        %v531 = vadd.f32 0.0, %v530
        %532 = vmatmul.f32.gmra.mxu0 %v380
        %v533 = vpop.f32.mrf.mxu0
        %v534 = vadd.f32 0.0, %v533
        %535 = vmatmul.f32.gmra.mxu0 %v383
        %v536 = vpop.f32.mrf.mxu0
        %v537 = vadd.f32 0.0, %v536
        %538 = vmatmul.f32.gmra.mxu0 %v385
        %v539 = vpop.f32.mrf.mxu0
        %v540 = vadd.f32 0.0, %v539
        %541 = vmatmul.f32.gmra.mxu0 %v388
        %v542 = vpop.f32.mrf.mxu0
        %v543 = vadd.f32 0.0, %v542
        %544 = vmatmul.f32.gmra.mxu0 %v390
        %v545 = vpop.f32.mrf.mxu0
        %v546 = vadd.f32 0.0, %v545
        %547 = vmatmul.f32.gmra.mxu0 %v393
        %v548 = vpop.f32.mrf.mxu0
        %v549 = vadd.f32 0.0, %v548
        %550 = vmatmul.f32.gmra.mxu0 %v395
        %v551 = vpop.f32.mrf.mxu0
        %v552 = vadd.f32 0.0, %v551
        %553 = vmatmul.f32.gmra.mxu0 %v398
        %v554 = vpop.f32.mrf.mxu0
        %v555 = vadd.f32 0.0, %v554
        %556 = vmatmul.f32.gmra.mxu0 %v400
        %v557 = vpop.f32.mrf.mxu0
        %v558 = vadd.f32 0.0, %v557
        %559 = vmatmul.f32.gmra.mxu0 %v403
        %v560 = vpop.f32.mrf.mxu0
        %v561 = vadd.f32 0.0, %v560
        %562 = vmatmul.f32.gmra.mxu0 %v405
        %v563 = vpop.f32.mrf.mxu0
        %v564 = vadd.f32 0.0, %v563
        %565 = vmatmul.f32.gmra.mxu0 %v408
        %v566 = vpop.f32.mrf.mxu0
        %v567 = vadd.f32 0.0, %v566
        %568 = vmatmul.f32.gmra.mxu0 %v410
        %v569 = vpop.f32.mrf.mxu0
        %v570 = vadd.f32 0.0, %v569
        %571 = vmatmul.f32.gmra.mxu0 %v413
        %v572 = vpop.f32.mrf.mxu0
        %v573 = vadd.f32 0.0, %v572
        %574 = vmatmul.f32.gmra.mxu0 %v415
        %v575 = vpop.f32.mrf.mxu0
        %v576 = vadd.f32 0.0, %v575
        %577 = vdwg.mxu0
        %578 = vmatpush.msra.mxu0 %v286
        %579 = vmatpush.msra.mxu0 %v285
        %580 = vmatpush.msra.mxu0 %v284
        %581 = vmatpush.msra.mxu0 %v283
        %582 = vmatpush.msra.mxu0 %v282
        %583 = vmatpush.msra.mxu0 %v281
        %584 = vmatpush.msra.mxu0 %v280
        %585 = vmatpush.msra.mxu0 %v279
        %586 = vmatpush.msra.mxu0 %v278
        %587 = vmatpush.msra.mxu0 %v277
        %588 = vmatpush.msra.mxu0 %v276
        %589 = vmatpush.msra.mxu0 %v275
        %590 = vmatpush.msra.mxu0 %v274
        %591 = vmatpush.msra.mxu0 %v273
        %592 = vmatpush.msra.mxu0 %v272
        %593 = vmatpush.msra.mxu0 %v271
        %594 = vmatmul.f32.gmra.mxu0 %v211
        %v595 = vpop.f32.mrf.mxu0
        %v596 = vadd.f32 %v483, %v595
        %597 = vmatmul.f32.gmra.mxu0 %v212
        %v598 = vpop.f32.mrf.mxu0
        %v599 = vadd.f32 %v486, %v598
        %600 = vmatmul.f32.gmra.mxu0 %v214
        %v601 = vpop.f32.mrf.mxu0
        %v602 = vadd.f32 %v489, %v601
        %603 = vmatmul.f32.gmra.mxu0 %v215
        %v604 = vpop.f32.mrf.mxu0
        %v605 = vadd.f32 %v492, %v604
        %606 = vmatmul.f32.gmra.mxu0 %v217
        %v607 = vpop.f32.mrf.mxu0
        %v608 = vadd.f32 %v495, %v607
        %609 = vmatmul.f32.gmra.mxu0 %v218
        %v610 = vpop.f32.mrf.mxu0
        %v611 = vadd.f32 %v498, %v610
        %612 = vmatmul.f32.gmra.mxu0 %v220
        %v613 = vpop.f32.mrf.mxu0
        %v614 = vadd.f32 %v501, %v613
        %615 = vmatmul.f32.gmra.mxu0 %v221
        %v616 = vpop.f32.mrf.mxu0
        %v617 = vadd.f32 %v504, %v616
        %618 = vmatmul.f32.gmra.mxu0 %v223
        %v619 = vpop.f32.mrf.mxu0
        %v620 = vadd.f32 %v507, %v619
        %621 = vmatmul.f32.gmra.mxu0 %v224
        %v622 = vpop.f32.mrf.mxu0
        %v623 = vadd.f32 %v510, %v622
        %624 = vmatmul.f32.gmra.mxu0 %v226
        %v625 = vpop.f32.mrf.mxu0
        %v626 = vadd.f32 %v513, %v625
        %627 = vmatmul.f32.gmra.mxu0 %v227
        %v628 = vpop.f32.mrf.mxu0
        %v629 = vadd.f32 %v516, %v628
        %630 = vmatmul.f32.gmra.mxu0 %v229
        %v631 = vpop.f32.mrf.mxu0
        %v632 = vadd.f32 %v519, %v631
        %633 = vmatmul.f32.gmra.mxu0 %v230
        %v634 = vpop.f32.mrf.mxu0
        %v635 = vadd.f32 %v522, %v634
        %636 = vmatmul.f32.gmra.mxu0 %v232
        %v637 = vpop.f32.mrf.mxu0
        %v638 = vadd.f32 %v525, %v637
        %639 = vmatmul.f32.gmra.mxu0 %v233
        %v640 = vpop.f32.mrf.mxu0
        %v641 = vadd.f32 %v528, %v640
        %642 = vmatmul.f32.gmra.mxu0 %v235
        %v643 = vpop.f32.mrf.mxu0
        %v644 = vadd.f32 %v531, %v643
        %645 = vmatmul.f32.gmra.mxu0 %v236
        %v646 = vpop.f32.mrf.mxu0
        %v647 = vadd.f32 %v534, %v646
        %648 = vmatmul.f32.gmra.mxu0 %v238
        %v649 = vpop.f32.mrf.mxu0
        %v650 = vadd.f32 %v537, %v649
        %651 = vmatmul.f32.gmra.mxu0 %v239
        %v652 = vpop.f32.mrf.mxu0
        %v653 = vadd.f32 %v540, %v652
        %654 = vmatmul.f32.gmra.mxu0 %v241
        %v655 = vpop.f32.mrf.mxu0
        %v656 = vadd.f32 %v543, %v655
        %657 = vmatmul.f32.gmra.mxu0 %v242
        %v658 = vpop.f32.mrf.mxu0
        %v659 = vadd.f32 %v546, %v658
        %660 = vmatmul.f32.gmra.mxu0 %v244
        %v661 = vpop.f32.mrf.mxu0
        %v662 = vadd.f32 %v549, %v661
        %663 = vmatmul.f32.gmra.mxu0 %v245
        %v664 = vpop.f32.mrf.mxu0
        %v665 = vadd.f32 %v552, %v664
        %666 = vmatmul.f32.gmra.mxu0 %v247
        %v667 = vpop.f32.mrf.mxu0
        %v668 = vadd.f32 %v555, %v667
        %669 = vmatmul.f32.gmra.mxu0 %v248
        %v670 = vpop.f32.mrf.mxu0
        %v671 = vadd.f32 %v558, %v670
        %672 = vmatmul.f32.gmra.mxu0 %v250
        %v673 = vpop.f32.mrf.mxu0
        %v674 = vadd.f32 %v561, %v673
        %675 = vmatmul.f32.gmra.mxu0 %v251
        %v676 = vpop.f32.mrf.mxu0
        %v677 = vadd.f32 %v564, %v676
        %678 = vmatmul.f32.gmra.mxu0 %v253
        %v679 = vpop.f32.mrf.mxu0
        %v680 = vadd.f32 %v567, %v679
        %681 = vmatmul.f32.gmra.mxu0 %v254
        %v682 = vpop.f32.mrf.mxu0
        %v683 = vadd.f32 %v570, %v682
        %684 = vmatmul.f32.gmra.mxu0 %v256
        %v685 = vpop.f32.mrf.mxu0
        %v686 = vadd.f32 %v573, %v685
        %687 = vmatmul.f32.gmra.mxu0 %v257
        %v688 = vpop.f32.mrf.mxu0
        %v689 = vadd.f32 %v576, %v688
        %690 = vdwg.mxu0
        %vm691 = vcmask 1043456
        %v692 = vrot.slane %v211, 4
        %v693 = vrot.slane %v212, 4
        %v694 = vsel %vm691, %v692, %v693
        %v695 = vrot.slane %v213, 4
        %v696 = vsel %vm691, %v693, %v695
        %v697 = vrot.slane %v214, 4
        %v698 = vrot.slane %v215, 4
        %v699 = vsel %vm691, %v697, %v698
        %v700 = vrot.slane %v216, 4
        %v701 = vsel %vm691, %v698, %v700
        %v702 = vrot.slane %v217, 4
        %v703 = vrot.slane %v218, 4
        %v704 = vsel %vm691, %v702, %v703
        %v705 = vrot.slane %v219, 4
        %v706 = vsel %vm691, %v703, %v705
        %v707 = vrot.slane %v220, 4
        %v708 = vrot.slane %v221, 4
        %v709 = vsel %vm691, %v707, %v708
        %v710 = vrot.slane %v222, 4
        %v711 = vsel %vm691, %v708, %v710
        %v712 = vrot.slane %v223, 4
        %v713 = vrot.slane %v224, 4
        %v714 = vsel %vm691, %v712, %v713
        %v715 = vrot.slane %v225, 4
        %v716 = vsel %vm691, %v713, %v715
        %v717 = vrot.slane %v226, 4
        %v718 = vrot.slane %v227, 4
        %v719 = vsel %vm691, %v717, %v718
        %v720 = vrot.slane %v228, 4
        %v721 = vsel %vm691, %v718, %v720
        %v722 = vrot.slane %v229, 4
        %v723 = vrot.slane %v230, 4
        %v724 = vsel %vm691, %v722, %v723
        %v725 = vrot.slane %v231, 4
        %v726 = vsel %vm691, %v723, %v725
        %v727 = vrot.slane %v232, 4
        %v728 = vrot.slane %v233, 4
        %v729 = vsel %vm691, %v727, %v728
        %v730 = vrot.slane %v234, 4
        %v731 = vsel %vm691, %v728, %v730
        %v732 = vrot.slane %v235, 4
        %v733 = vrot.slane %v236, 4
        %v734 = vsel %vm691, %v732, %v733
        %v735 = vrot.slane %v237, 4
        %v736 = vsel %vm691, %v733, %v735
        %v737 = vrot.slane %v238, 4
        %v738 = vrot.slane %v239, 4
        %v739 = vsel %vm691, %v737, %v738
        %v740 = vrot.slane %v240, 4
        %v741 = vsel %vm691, %v738, %v740
        %v742 = vrot.slane %v241, 4
        %v743 = vrot.slane %v242, 4
        %v744 = vsel %vm691, %v742, %v743
        %v745 = vrot.slane %v243, 4
        %v746 = vsel %vm691, %v743, %v745
        %v747 = vrot.slane %v244, 4
        %v748 = vrot.slane %v245, 4
        %v749 = vsel %vm691, %v747, %v748
        %v750 = vrot.slane %v246, 4
        %v751 = vsel %vm691, %v748, %v750
        %v752 = vrot.slane %v247, 4
        %v753 = vrot.slane %v248, 4
        %v754 = vsel %vm691, %v752, %v753
        %v755 = vrot.slane %v249, 4
        %v756 = vsel %vm691, %v753, %v755
        %v757 = vrot.slane %v250, 4
        %v758 = vrot.slane %v251, 4
        %v759 = vsel %vm691, %v757, %v758
        %v760 = vrot.slane %v252, 4
        %v761 = vsel %vm691, %v758, %v760
        %v762 = vrot.slane %v253, 4
        %v763 = vrot.slane %v254, 4
        %v764 = vsel %vm691, %v762, %v763
        %v765 = vrot.slane %v255, 4
        %v766 = vsel %vm691, %v763, %v765
        %v767 = vrot.slane %v256, 4
        %v768 = vrot.slane %v257, 4
        %v769 = vsel %vm691, %v767, %v768
        %v770 = vrot.slane %v258, 4
        %v771 = vsel %vm691, %v768, %v770
        %s804 = scalar_lea.vmem %s1, 256
        %v805 = vld [vmem:[%s804] sm:$0xff]
        %v806 = vld [vmem:[%s804 + $0x8] sm:$0xff]
        %v807 = vld [vmem:[%s804 + $0x10] sm:$0xff]
        %v808 = vld [vmem:[%s804 + $0x18] sm:$0xff]
        %v809 = vld [vmem:[%s804 + $0x20] sm:$0xff]
        %v810 = vld [vmem:[%s804 + $0x28] sm:$0xff]
        %v811 = vld [vmem:[%s804 + $0x30] sm:$0xff]
        %v812 = vld [vmem:[%s804 + $0x38] sm:$0xff]
        %v813 = vld [vmem:[%s804 + $0x40] sm:$0xff]
        %v814 = vld [vmem:[%s804 + $0x48] sm:$0xff]
        %v815 = vld [vmem:[%s804 + $0x50] sm:$0xff]
        %v816 = vld [vmem:[%s804 + $0x58] sm:$0xff]
        %v817 = vld [vmem:[%s804 + $0x60] sm:$0xff]
        %v818 = vld [vmem:[%s804 + $0x68] sm:$0xff]
        %v819 = vld [vmem:[%s804 + $0x70] sm:$0xff]
        %v820 = vld [vmem:[%s804 + $0x78] sm:$0xff]
        %821 = vmatpush.msra.mxu0 %v820
        %822 = vmatpush.msra.mxu0 %v819
        %823 = vmatpush.msra.mxu0 %v818
        %824 = vmatpush.msra.mxu0 %v817
        %825 = vmatpush.msra.mxu0 %v816
        %826 = vmatpush.msra.mxu0 %v815
        %827 = vmatpush.msra.mxu0 %v814
        %828 = vmatpush.msra.mxu0 %v813
        %829 = vmatpush.msra.mxu0 %v812
        %830 = vmatpush.msra.mxu0 %v811
        %831 = vmatpush.msra.mxu0 %v810
        %832 = vmatpush.msra.mxu0 %v809
        %833 = vmatpush.msra.mxu0 %v808
        %834 = vmatpush.msra.mxu0 %v807
        %835 = vmatpush.msra.mxu0 %v806
        %836 = vmatpush.msra.mxu0 %v805
        %837 = vmatmul.f32.gmra.mxu0 %v694
        %v838 = vpop.f32.mrf.mxu0
        %v839 = vadd.f32 0.0, %v838
        %840 = vmatmul.f32.gmra.mxu0 %v696
        %v841 = vpop.f32.mrf.mxu0
        %v842 = vadd.f32 0.0, %v841
        %843 = vmatmul.f32.gmra.mxu0 %v699
        %v844 = vpop.f32.mrf.mxu0
        %v845 = vadd.f32 0.0, %v844
        %846 = vmatmul.f32.gmra.mxu0 %v701
        %v847 = vpop.f32.mrf.mxu0
        %v848 = vadd.f32 0.0, %v847
        %849 = vmatmul.f32.gmra.mxu0 %v704
        %v850 = vpop.f32.mrf.mxu0
        %v851 = vadd.f32 0.0, %v850
        %852 = vmatmul.f32.gmra.mxu0 %v706
        %v853 = vpop.f32.mrf.mxu0
        %v854 = vadd.f32 0.0, %v853
        %855 = vmatmul.f32.gmra.mxu0 %v709
        %v856 = vpop.f32.mrf.mxu0
        %v857 = vadd.f32 0.0, %v856
        %858 = vmatmul.f32.gmra.mxu0 %v711
        %v859 = vpop.f32.mrf.mxu0
        %v860 = vadd.f32 0.0, %v859
        %861 = vmatmul.f32.gmra.mxu0 %v714
        %v862 = vpop.f32.mrf.mxu0
        %v863 = vadd.f32 0.0, %v862
        %864 = vmatmul.f32.gmra.mxu0 %v716
        %v865 = vpop.f32.mrf.mxu0
        %v866 = vadd.f32 0.0, %v865
        %867 = vmatmul.f32.gmra.mxu0 %v719
        %v868 = vpop.f32.mrf.mxu0
        %v869 = vadd.f32 0.0, %v868
        %870 = vmatmul.f32.gmra.mxu0 %v721
        %v871 = vpop.f32.mrf.mxu0
        %v872 = vadd.f32 0.0, %v871
        %873 = vmatmul.f32.gmra.mxu0 %v724
        %v874 = vpop.f32.mrf.mxu0
        %v875 = vadd.f32 0.0, %v874
        %876 = vmatmul.f32.gmra.mxu0 %v726
        %v877 = vpop.f32.mrf.mxu0
        %v878 = vadd.f32 0.0, %v877
        %879 = vmatmul.f32.gmra.mxu0 %v729
        %v880 = vpop.f32.mrf.mxu0
        %v881 = vadd.f32 0.0, %v880
        %882 = vmatmul.f32.gmra.mxu0 %v731
        %v883 = vpop.f32.mrf.mxu0
        %v884 = vadd.f32 0.0, %v883
        %885 = vmatmul.f32.gmra.mxu0 %v734
        %v886 = vpop.f32.mrf.mxu0
        %v887 = vadd.f32 0.0, %v886
        %888 = vmatmul.f32.gmra.mxu0 %v736
        %v889 = vpop.f32.mrf.mxu0
        %v890 = vadd.f32 0.0, %v889
        %891 = vmatmul.f32.gmra.mxu0 %v739
        %v892 = vpop.f32.mrf.mxu0
        %v893 = vadd.f32 0.0, %v892
        %894 = vmatmul.f32.gmra.mxu0 %v741
        %v895 = vpop.f32.mrf.mxu0
        %v896 = vadd.f32 0.0, %v895
        %897 = vmatmul.f32.gmra.mxu0 %v744
        %v898 = vpop.f32.mrf.mxu0
        %v899 = vadd.f32 0.0, %v898
        %900 = vmatmul.f32.gmra.mxu0 %v746
        %v901 = vpop.f32.mrf.mxu0
        %v902 = vadd.f32 0.0, %v901
        %903 = vmatmul.f32.gmra.mxu0 %v749
        %v904 = vpop.f32.mrf.mxu0
        %v905 = vadd.f32 0.0, %v904
        %906 = vmatmul.f32.gmra.mxu0 %v751
        %v907 = vpop.f32.mrf.mxu0
        %v908 = vadd.f32 0.0, %v907
        %909 = vmatmul.f32.gmra.mxu0 %v754
        %v910 = vpop.f32.mrf.mxu0
        %v911 = vadd.f32 0.0, %v910
        %912 = vmatmul.f32.gmra.mxu0 %v756
        %v913 = vpop.f32.mrf.mxu0
        %v914 = vadd.f32 0.0, %v913
        %915 = vmatmul.f32.gmra.mxu0 %v759
        %v916 = vpop.f32.mrf.mxu0
        %v917 = vadd.f32 0.0, %v916
        %918 = vmatmul.f32.gmra.mxu0 %v761
        %v919 = vpop.f32.mrf.mxu0
        %v920 = vadd.f32 0.0, %v919
        %921 = vmatmul.f32.gmra.mxu0 %v764
        %v922 = vpop.f32.mrf.mxu0
        %v923 = vadd.f32 0.0, %v922
        %924 = vmatmul.f32.gmra.mxu0 %v766
        %v925 = vpop.f32.mrf.mxu0
        %v926 = vadd.f32 0.0, %v925
        %927 = vmatmul.f32.gmra.mxu0 %v769
        %v928 = vpop.f32.mrf.mxu0
        %v929 = vadd.f32 0.0, %v928
        %930 = vmatmul.f32.gmra.mxu0 %v771
        %v931 = vpop.f32.mrf.mxu0
        %v932 = vadd.f32 0.0, %v931
        %933 = vdwg.mxu0
        %v934 = vadd.f32 %v596, %v839
        %v935 = vadd.f32 %v599, %v842
        %v936 = vadd.f32 %v602, %v845
        %v937 = vadd.f32 %v605, %v848
        %v938 = vadd.f32 %v608, %v851
        %v939 = vadd.f32 %v611, %v854
        %v940 = vadd.f32 %v614, %v857
        %v941 = vadd.f32 %v617, %v860
        %v942 = vadd.f32 %v620, %v863
        %v943 = vadd.f32 %v623, %v866
        %v944 = vadd.f32 %v626, %v869
        %v945 = vadd.f32 %v629, %v872
        %v946 = vadd.f32 %v632, %v875
        %v947 = vadd.f32 %v635, %v878
        %v948 = vadd.f32 %v638, %v881
        %v949 = vadd.f32 %v641, %v884
        %v950 = vadd.f32 %v644, %v887
        %v951 = vadd.f32 %v647, %v890
        %v952 = vadd.f32 %v650, %v893
        %v953 = vadd.f32 %v653, %v896
        %v954 = vadd.f32 %v656, %v899
        %v955 = vadd.f32 %v659, %v902
        %v956 = vadd.f32 %v662, %v905
        %v957 = vadd.f32 %v665, %v908
        %v958 = vadd.f32 %v668, %v911
        %v959 = vadd.f32 %v671, %v914
        %v960 = vadd.f32 %v674, %v917
        %v961 = vadd.f32 %v677, %v920
        %v962 = vadd.f32 %v680, %v923
        %v963 = vadd.f32 %v683, %v926
        %v964 = vadd.f32 %v686, %v929
        %v965 = vadd.f32 %v689, %v932
        %s966 = scalar_lea.vmem %s1, 384
        %v967 = vld [vmem:[%s966] sm:$0xff]
        %v968 = vld [vmem:[%s966 + $0x8] sm:$0xff]
        %v969 = vld [vmem:[%s966 + $0x10] sm:$0xff]
        %v970 = vld [vmem:[%s966 + $0x18] sm:$0xff]
        %v971 = vld [vmem:[%s966 + $0x20] sm:$0xff]
        %v972 = vld [vmem:[%s966 + $0x28] sm:$0xff]
        %v973 = vld [vmem:[%s966 + $0x30] sm:$0xff]
        %v974 = vld [vmem:[%s966 + $0x38] sm:$0xff]
        %v975 = vld [vmem:[%s966 + $0x40] sm:$0xff]
        %v976 = vld [vmem:[%s966 + $0x48] sm:$0xff]
        %v977 = vld [vmem:[%s966 + $0x50] sm:$0xff]
        %v978 = vld [vmem:[%s966 + $0x58] sm:$0xff]
        %v979 = vld [vmem:[%s966 + $0x60] sm:$0xff]
        %v980 = vld [vmem:[%s966 + $0x68] sm:$0xff]
        %v981 = vld [vmem:[%s966 + $0x70] sm:$0xff]
        %v982 = vld [vmem:[%s966 + $0x78] sm:$0xff]
        %983 = vmatpush.msra.mxu0 %v982
        %984 = vmatpush.msra.mxu0 %v981
        %985 = vmatpush.msra.mxu0 %v980
        %986 = vmatpush.msra.mxu0 %v979
        %987 = vmatpush.msra.mxu0 %v978
        %988 = vmatpush.msra.mxu0 %v977
        %989 = vmatpush.msra.mxu0 %v976
        %990 = vmatpush.msra.mxu0 %v975
        %991 = vmatpush.msra.mxu0 %v974
        %992 = vmatpush.msra.mxu0 %v973
        %993 = vmatpush.msra.mxu0 %v972
        %994 = vmatpush.msra.mxu0 %v971
        %995 = vmatpush.msra.mxu0 %v970
        %996 = vmatpush.msra.mxu0 %v969
        %997 = vmatpush.msra.mxu0 %v968
        %998 = vmatpush.msra.mxu0 %v967
        %999 = vmatmul.f32.gmra.mxu0 %v217
        %v1000 = vpop.f32.mrf.mxu0
        %v1001 = vadd.f32 0.0, %v1000
        %1002 = vmatmul.f32.gmra.mxu0 %v218
        %v1003 = vpop.f32.mrf.mxu0
        %v1004 = vadd.f32 0.0, %v1003
        %1005 = vmatmul.f32.gmra.mxu0 %v220
        %v1006 = vpop.f32.mrf.mxu0
        %v1007 = vadd.f32 0.0, %v1006
        %1008 = vmatmul.f32.gmra.mxu0 %v221
        %v1009 = vpop.f32.mrf.mxu0
        %v1010 = vadd.f32 0.0, %v1009
        %1011 = vmatmul.f32.gmra.mxu0 %v223
        %v1012 = vpop.f32.mrf.mxu0
        %v1013 = vadd.f32 0.0, %v1012
        %1014 = vmatmul.f32.gmra.mxu0 %v224
        %v1015 = vpop.f32.mrf.mxu0
        %v1016 = vadd.f32 0.0, %v1015
        %1017 = vmatmul.f32.gmra.mxu0 %v226
        %v1018 = vpop.f32.mrf.mxu0
        %v1019 = vadd.f32 0.0, %v1018
        %1020 = vmatmul.f32.gmra.mxu0 %v227
        %v1021 = vpop.f32.mrf.mxu0
        %v1022 = vadd.f32 0.0, %v1021
        %1023 = vmatmul.f32.gmra.mxu0 %v229
        %v1024 = vpop.f32.mrf.mxu0
        %v1025 = vadd.f32 0.0, %v1024
        %1026 = vmatmul.f32.gmra.mxu0 %v230
        %v1027 = vpop.f32.mrf.mxu0
        %v1028 = vadd.f32 0.0, %v1027
        %1029 = vmatmul.f32.gmra.mxu0 %v232
        %v1030 = vpop.f32.mrf.mxu0
        %v1031 = vadd.f32 0.0, %v1030
        %1032 = vmatmul.f32.gmra.mxu0 %v233
        %v1033 = vpop.f32.mrf.mxu0
        %v1034 = vadd.f32 0.0, %v1033
        %1035 = vmatmul.f32.gmra.mxu0 %v235
        %v1036 = vpop.f32.mrf.mxu0
        %v1037 = vadd.f32 0.0, %v1036
        %1038 = vmatmul.f32.gmra.mxu0 %v236
        %v1039 = vpop.f32.mrf.mxu0
        %v1040 = vadd.f32 0.0, %v1039
        %1041 = vmatmul.f32.gmra.mxu0 %v238
        %v1042 = vpop.f32.mrf.mxu0
        %v1043 = vadd.f32 0.0, %v1042
        %1044 = vmatmul.f32.gmra.mxu0 %v239
        %v1045 = vpop.f32.mrf.mxu0
        %v1046 = vadd.f32 0.0, %v1045
        %1047 = vmatmul.f32.gmra.mxu0 %v241
        %v1048 = vpop.f32.mrf.mxu0
        %v1049 = vadd.f32 0.0, %v1048
        %1050 = vmatmul.f32.gmra.mxu0 %v242
        %v1051 = vpop.f32.mrf.mxu0
        %v1052 = vadd.f32 0.0, %v1051
        %1053 = vmatmul.f32.gmra.mxu0 %v244
        %v1054 = vpop.f32.mrf.mxu0
        %v1055 = vadd.f32 0.0, %v1054
        %1056 = vmatmul.f32.gmra.mxu0 %v245
        %v1057 = vpop.f32.mrf.mxu0
        %v1058 = vadd.f32 0.0, %v1057
        %1059 = vmatmul.f32.gmra.mxu0 %v247
        %v1060 = vpop.f32.mrf.mxu0
        %v1061 = vadd.f32 0.0, %v1060
        %1062 = vmatmul.f32.gmra.mxu0 %v248
        %v1063 = vpop.f32.mrf.mxu0
        %v1064 = vadd.f32 0.0, %v1063
        %1065 = vmatmul.f32.gmra.mxu0 %v250
        %v1066 = vpop.f32.mrf.mxu0
        %v1067 = vadd.f32 0.0, %v1066
        %1068 = vmatmul.f32.gmra.mxu0 %v251
        %v1069 = vpop.f32.mrf.mxu0
        %v1070 = vadd.f32 0.0, %v1069
        %1071 = vmatmul.f32.gmra.mxu0 %v253
        %v1072 = vpop.f32.mrf.mxu0
        %v1073 = vadd.f32 0.0, %v1072
        %1074 = vmatmul.f32.gmra.mxu0 %v254
        %v1075 = vpop.f32.mrf.mxu0
        %v1076 = vadd.f32 0.0, %v1075
        %1077 = vmatmul.f32.gmra.mxu0 %v256
        %v1078 = vpop.f32.mrf.mxu0
        %v1079 = vadd.f32 0.0, %v1078
        %1080 = vmatmul.f32.gmra.mxu0 %v257
        %v1081 = vpop.f32.mrf.mxu0
        %v1082 = vadd.f32 0.0, %v1081
        %1083 = vmatmul.f32.gmra.mxu0 %v259
        %v1084 = vpop.f32.mrf.mxu0
        %v1085 = vadd.f32 0.0, %v1084
        %1086 = vmatmul.f32.gmra.mxu0 %v260
        %v1087 = vpop.f32.mrf.mxu0
        %v1088 = vadd.f32 0.0, %v1087
        %1089 = vmatmul.f32.gmra.mxu0 %v262
        %v1090 = vpop.f32.mrf.mxu0
        %v1091 = vadd.f32 0.0, %v1090
        %1092 = vmatmul.f32.gmra.mxu0 %v263
        %v1093 = vpop.f32.mrf.mxu0
        %v1094 = vadd.f32 0.0, %v1093
        %1095 = vdwg.mxu0
        %v1096 = vadd.f32 %v934, %v1001
        %v1097 = vadd.f32 %v935, %v1004
        %v1098 = vadd.f32 %v936, %v1007
        %v1099 = vadd.f32 %v937, %v1010
        %v1100 = vadd.f32 %v938, %v1013
        %v1101 = vadd.f32 %v939, %v1016
        %v1102 = vadd.f32 %v940, %v1019
        %v1103 = vadd.f32 %v941, %v1022
        %v1104 = vadd.f32 %v942, %v1025
        %v1105 = vadd.f32 %v943, %v1028
        %v1106 = vadd.f32 %v944, %v1031
        %v1107 = vadd.f32 %v945, %v1034
        %v1108 = vadd.f32 %v946, %v1037
        %v1109 = vadd.f32 %v947, %v1040
        %v1110 = vadd.f32 %v948, %v1043
        %v1111 = vadd.f32 %v949, %v1046
        %v1112 = vadd.f32 %v950, %v1049
        %v1113 = vadd.f32 %v951, %v1052
        %v1114 = vadd.f32 %v952, %v1055
        %v1115 = vadd.f32 %v953, %v1058
        %v1116 = vadd.f32 %v954, %v1061
        %v1117 = vadd.f32 %v955, %v1064
        %v1118 = vadd.f32 %v956, %v1067
        %v1119 = vadd.f32 %v957, %v1070
        %v1120 = vadd.f32 %v958, %v1073
        %v1121 = vadd.f32 %v959, %v1076
        %v1122 = vadd.f32 %v960, %v1079
        %v1123 = vadd.f32 %v961, %v1082
        %v1124 = vadd.f32 %v962, %v1085
        %v1125 = vadd.f32 %v963, %v1088
        %v1126 = vadd.f32 %v964, %v1091
        %v1127 = vadd.f32 %v965, %v1094
        %v1134 = vrot.slane %v259, 2
        %v1135 = vrot.slane %v260, 2
        %v1136 = vsel %vm335, %v1134, %v1135
        %v1137 = vrot.slane %v261, 2
        %v1138 = vsel %vm335, %v1135, %v1137
        %v1139 = vrot.slane %v262, 2
        %v1140 = vrot.slane %v263, 2
        %v1141 = vsel %vm335, %v1139, %v1140
        %v1142 = vrot.slane %v264, 2
        %v1143 = vsel %vm335, %v1140, %v1142
        %s1148 = scalar_lea.vmem %s1, 512
        %v1149 = vld [vmem:[%s1148] sm:$0xff]
        %v1150 = vld [vmem:[%s1148 + $0x8] sm:$0xff]
        %v1151 = vld [vmem:[%s1148 + $0x10] sm:$0xff]
        %v1152 = vld [vmem:[%s1148 + $0x18] sm:$0xff]
        %v1153 = vld [vmem:[%s1148 + $0x20] sm:$0xff]
        %v1154 = vld [vmem:[%s1148 + $0x28] sm:$0xff]
        %v1155 = vld [vmem:[%s1148 + $0x30] sm:$0xff]
        %v1156 = vld [vmem:[%s1148 + $0x38] sm:$0xff]
        %v1157 = vld [vmem:[%s1148 + $0x40] sm:$0xff]
        %v1158 = vld [vmem:[%s1148 + $0x48] sm:$0xff]
        %v1159 = vld [vmem:[%s1148 + $0x50] sm:$0xff]
        %v1160 = vld [vmem:[%s1148 + $0x58] sm:$0xff]
        %v1161 = vld [vmem:[%s1148 + $0x60] sm:$0xff]
        %v1162 = vld [vmem:[%s1148 + $0x68] sm:$0xff]
        %v1163 = vld [vmem:[%s1148 + $0x70] sm:$0xff]
        %v1164 = vld [vmem:[%s1148 + $0x78] sm:$0xff]
        %1165 = vmatpush.msra.mxu0 %v1164
        %1166 = vmatpush.msra.mxu0 %v1163
        %1167 = vmatpush.msra.mxu0 %v1162
        %1168 = vmatpush.msra.mxu0 %v1161
        %1169 = vmatpush.msra.mxu0 %v1160
        %1170 = vmatpush.msra.mxu0 %v1159
        %1171 = vmatpush.msra.mxu0 %v1158
        %1172 = vmatpush.msra.mxu0 %v1157
        %1173 = vmatpush.msra.mxu0 %v1156
        %1174 = vmatpush.msra.mxu0 %v1155
        %1175 = vmatpush.msra.mxu0 %v1154
        %1176 = vmatpush.msra.mxu0 %v1153
        %1177 = vmatpush.msra.mxu0 %v1152
        %1178 = vmatpush.msra.mxu0 %v1151
        %1179 = vmatpush.msra.mxu0 %v1150
        %1180 = vmatpush.msra.mxu0 %v1149
        %1181 = vmatmul.f32.gmra.mxu0 %v348
        %v1182 = vpop.f32.mrf.mxu0
        %v1183 = vadd.f32 0.0, %v1182
        %1184 = vmatmul.f32.gmra.mxu0 %v350
        %v1185 = vpop.f32.mrf.mxu0
        %v1186 = vadd.f32 0.0, %v1185
        %1187 = vmatmul.f32.gmra.mxu0 %v353
        %v1188 = vpop.f32.mrf.mxu0
        %v1189 = vadd.f32 0.0, %v1188
        %1190 = vmatmul.f32.gmra.mxu0 %v355
        %v1191 = vpop.f32.mrf.mxu0
        %v1192 = vadd.f32 0.0, %v1191
        %1193 = vmatmul.f32.gmra.mxu0 %v358
        %v1194 = vpop.f32.mrf.mxu0
        %v1195 = vadd.f32 0.0, %v1194
        %1196 = vmatmul.f32.gmra.mxu0 %v360
        %v1197 = vpop.f32.mrf.mxu0
        %v1198 = vadd.f32 0.0, %v1197
        %1199 = vmatmul.f32.gmra.mxu0 %v363
        %v1200 = vpop.f32.mrf.mxu0
        %v1201 = vadd.f32 0.0, %v1200
        %1202 = vmatmul.f32.gmra.mxu0 %v365
        %v1203 = vpop.f32.mrf.mxu0
        %v1204 = vadd.f32 0.0, %v1203
        %1205 = vmatmul.f32.gmra.mxu0 %v368
        %v1206 = vpop.f32.mrf.mxu0
        %v1207 = vadd.f32 0.0, %v1206
        %1208 = vmatmul.f32.gmra.mxu0 %v370
        %v1209 = vpop.f32.mrf.mxu0
        %v1210 = vadd.f32 0.0, %v1209
        %1211 = vmatmul.f32.gmra.mxu0 %v373
        %v1212 = vpop.f32.mrf.mxu0
        %v1213 = vadd.f32 0.0, %v1212
        %1214 = vmatmul.f32.gmra.mxu0 %v375
        %v1215 = vpop.f32.mrf.mxu0
        %v1216 = vadd.f32 0.0, %v1215
        %1217 = vmatmul.f32.gmra.mxu0 %v378
        %v1218 = vpop.f32.mrf.mxu0
        %v1219 = vadd.f32 0.0, %v1218
        %1220 = vmatmul.f32.gmra.mxu0 %v380
        %v1221 = vpop.f32.mrf.mxu0
        %v1222 = vadd.f32 0.0, %v1221
        %1223 = vmatmul.f32.gmra.mxu0 %v383
        %v1224 = vpop.f32.mrf.mxu0
        %v1225 = vadd.f32 0.0, %v1224
        %1226 = vmatmul.f32.gmra.mxu0 %v385
        %v1227 = vpop.f32.mrf.mxu0
        %v1228 = vadd.f32 0.0, %v1227
        %1229 = vmatmul.f32.gmra.mxu0 %v388
        %v1230 = vpop.f32.mrf.mxu0
        %v1231 = vadd.f32 0.0, %v1230
        %1232 = vmatmul.f32.gmra.mxu0 %v390
        %v1233 = vpop.f32.mrf.mxu0
        %v1234 = vadd.f32 0.0, %v1233
        %1235 = vmatmul.f32.gmra.mxu0 %v393
        %v1236 = vpop.f32.mrf.mxu0
        %v1237 = vadd.f32 0.0, %v1236
        %1238 = vmatmul.f32.gmra.mxu0 %v395
        %v1239 = vpop.f32.mrf.mxu0
        %v1240 = vadd.f32 0.0, %v1239
        %1241 = vmatmul.f32.gmra.mxu0 %v398
        %v1242 = vpop.f32.mrf.mxu0
        %v1243 = vadd.f32 0.0, %v1242
        %1244 = vmatmul.f32.gmra.mxu0 %v400
        %v1245 = vpop.f32.mrf.mxu0
        %v1246 = vadd.f32 0.0, %v1245
        %1247 = vmatmul.f32.gmra.mxu0 %v403
        %v1248 = vpop.f32.mrf.mxu0
        %v1249 = vadd.f32 0.0, %v1248
        %1250 = vmatmul.f32.gmra.mxu0 %v405
        %v1251 = vpop.f32.mrf.mxu0
        %v1252 = vadd.f32 0.0, %v1251
        %1253 = vmatmul.f32.gmra.mxu0 %v408
        %v1254 = vpop.f32.mrf.mxu0
        %v1255 = vadd.f32 0.0, %v1254
        %1256 = vmatmul.f32.gmra.mxu0 %v410
        %v1257 = vpop.f32.mrf.mxu0
        %v1258 = vadd.f32 0.0, %v1257
        %1259 = vmatmul.f32.gmra.mxu0 %v413
        %v1260 = vpop.f32.mrf.mxu0
        %v1261 = vadd.f32 0.0, %v1260
        %1262 = vmatmul.f32.gmra.mxu0 %v415
        %v1263 = vpop.f32.mrf.mxu0
        %v1264 = vadd.f32 0.0, %v1263
        %1265 = vmatmul.f32.gmra.mxu0 %v1136
        %v1266 = vpop.f32.mrf.mxu0
        %v1267 = vadd.f32 0.0, %v1266
        %1268 = vmatmul.f32.gmra.mxu0 %v1138
        %v1269 = vpop.f32.mrf.mxu0
        %v1270 = vadd.f32 0.0, %v1269
        %1271 = vmatmul.f32.gmra.mxu0 %v1141
        %v1272 = vpop.f32.mrf.mxu0
        %v1273 = vadd.f32 0.0, %v1272
        %1274 = vmatmul.f32.gmra.mxu0 %v1143
        %v1275 = vpop.f32.mrf.mxu0
        %v1276 = vadd.f32 0.0, %v1275
        %1277 = vdwg.mxu0
        %v1278 = vadd.f32 %v1096, %v1183
        %v1279 = vadd.f32 %v1097, %v1186
        %v1280 = vadd.f32 %v1098, %v1189
        %v1281 = vadd.f32 %v1099, %v1192
        %v1282 = vadd.f32 %v1100, %v1195
        %v1283 = vadd.f32 %v1101, %v1198
        %v1284 = vadd.f32 %v1102, %v1201
        %v1285 = vadd.f32 %v1103, %v1204
        %v1286 = vadd.f32 %v1104, %v1207
        %v1287 = vadd.f32 %v1105, %v1210
        %v1288 = vadd.f32 %v1106, %v1213
        %v1289 = vadd.f32 %v1107, %v1216
        %v1290 = vadd.f32 %v1108, %v1219
        %v1291 = vadd.f32 %v1109, %v1222
        %v1292 = vadd.f32 %v1110, %v1225
        %v1293 = vadd.f32 %v1111, %v1228
        %v1294 = vadd.f32 %v1112, %v1231
        %v1295 = vadd.f32 %v1113, %v1234
        %v1296 = vadd.f32 %v1114, %v1237
        %v1297 = vadd.f32 %v1115, %v1240
        %v1298 = vadd.f32 %v1116, %v1243
        %v1299 = vadd.f32 %v1117, %v1246
        %v1300 = vadd.f32 %v1118, %v1249
        %v1301 = vadd.f32 %v1119, %v1252
        %v1302 = vadd.f32 %v1120, %v1255
        %v1303 = vadd.f32 %v1121, %v1258
        %v1304 = vadd.f32 %v1122, %v1261
        %v1305 = vadd.f32 %v1123, %v1264
        %v1306 = vadd.f32 %v1124, %v1267
        %v1307 = vadd.f32 %v1125, %v1270
        %v1308 = vadd.f32 %v1126, %v1273
        %v1309 = vadd.f32 %v1127, %v1276
        %v1310 = vrot.slane %v259, 4
        %v1311 = vrot.slane %v260, 4
        %v1312 = vsel %vm691, %v1310, %v1311
        %v1313 = vrot.slane %v261, 4
        %v1314 = vsel %vm691, %v1311, %v1313
        %v1315 = vrot.slane %v262, 4
        %v1316 = vrot.slane %v263, 4
        %v1317 = vsel %vm691, %v1315, %v1316
        %v1318 = vrot.slane %v264, 4
        %v1319 = vsel %vm691, %v1316, %v1318
        %s1324 = scalar_lea.vmem %s1, 640
        %v1325 = vld [vmem:[%s1324] sm:$0xff]
        %v1326 = vld [vmem:[%s1324 + $0x8] sm:$0xff]
        %v1327 = vld [vmem:[%s1324 + $0x10] sm:$0xff]
        %v1328 = vld [vmem:[%s1324 + $0x18] sm:$0xff]
        %v1329 = vld [vmem:[%s1324 + $0x20] sm:$0xff]
        %v1330 = vld [vmem:[%s1324 + $0x28] sm:$0xff]
        %v1331 = vld [vmem:[%s1324 + $0x30] sm:$0xff]
        %v1332 = vld [vmem:[%s1324 + $0x38] sm:$0xff]
        %v1333 = vld [vmem:[%s1324 + $0x40] sm:$0xff]
        %v1334 = vld [vmem:[%s1324 + $0x48] sm:$0xff]
        %v1335 = vld [vmem:[%s1324 + $0x50] sm:$0xff]
        %v1336 = vld [vmem:[%s1324 + $0x58] sm:$0xff]
        %v1337 = vld [vmem:[%s1324 + $0x60] sm:$0xff]
        %v1338 = vld [vmem:[%s1324 + $0x68] sm:$0xff]
        %v1339 = vld [vmem:[%s1324 + $0x70] sm:$0xff]
        %v1340 = vld [vmem:[%s1324 + $0x78] sm:$0xff]
        %1341 = vmatpush.msra.mxu0 %v1340
        %1342 = vmatpush.msra.mxu0 %v1339
        %1343 = vmatpush.msra.mxu0 %v1338
        %1344 = vmatpush.msra.mxu0 %v1337
        %1345 = vmatpush.msra.mxu0 %v1336
        %1346 = vmatpush.msra.mxu0 %v1335
        %1347 = vmatpush.msra.mxu0 %v1334
        %1348 = vmatpush.msra.mxu0 %v1333
        %1349 = vmatpush.msra.mxu0 %v1332
        %1350 = vmatpush.msra.mxu0 %v1331
        %1351 = vmatpush.msra.mxu0 %v1330
        %1352 = vmatpush.msra.mxu0 %v1329
        %1353 = vmatpush.msra.mxu0 %v1328
        %1354 = vmatpush.msra.mxu0 %v1327
        %1355 = vmatpush.msra.mxu0 %v1326
        %1356 = vmatpush.msra.mxu0 %v1325
        %1357 = vmatmul.f32.gmra.mxu0 %v704
        %v1358 = vpop.f32.mrf.mxu0
        %v1359 = vadd.f32 0.0, %v1358
        %1360 = vmatmul.f32.gmra.mxu0 %v706
        %v1361 = vpop.f32.mrf.mxu0
        %v1362 = vadd.f32 0.0, %v1361
        %1363 = vmatmul.f32.gmra.mxu0 %v709
        %v1364 = vpop.f32.mrf.mxu0
        %v1365 = vadd.f32 0.0, %v1364
        %1366 = vmatmul.f32.gmra.mxu0 %v711
        %v1367 = vpop.f32.mrf.mxu0
        %v1368 = vadd.f32 0.0, %v1367
        %1369 = vmatmul.f32.gmra.mxu0 %v714
        %v1370 = vpop.f32.mrf.mxu0
        %v1371 = vadd.f32 0.0, %v1370
        %1372 = vmatmul.f32.gmra.mxu0 %v716
        %v1373 = vpop.f32.mrf.mxu0
        %v1374 = vadd.f32 0.0, %v1373
        %1375 = vmatmul.f32.gmra.mxu0 %v719
        %v1376 = vpop.f32.mrf.mxu0
        %v1377 = vadd.f32 0.0, %v1376
        %1378 = vmatmul.f32.gmra.mxu0 %v721
        %v1379 = vpop.f32.mrf.mxu0
        %v1380 = vadd.f32 0.0, %v1379
        %1381 = vmatmul.f32.gmra.mxu0 %v724
        %v1382 = vpop.f32.mrf.mxu0
        %v1383 = vadd.f32 0.0, %v1382
        %1384 = vmatmul.f32.gmra.mxu0 %v726
        %v1385 = vpop.f32.mrf.mxu0
        %v1386 = vadd.f32 0.0, %v1385
        %1387 = vmatmul.f32.gmra.mxu0 %v729
        %v1388 = vpop.f32.mrf.mxu0
        %v1389 = vadd.f32 0.0, %v1388
        %1390 = vmatmul.f32.gmra.mxu0 %v731
        %v1391 = vpop.f32.mrf.mxu0
        %v1392 = vadd.f32 0.0, %v1391
        %1393 = vmatmul.f32.gmra.mxu0 %v734
        %v1394 = vpop.f32.mrf.mxu0
        %v1395 = vadd.f32 0.0, %v1394
        %1396 = vmatmul.f32.gmra.mxu0 %v736
        %v1397 = vpop.f32.mrf.mxu0
        %v1398 = vadd.f32 0.0, %v1397
        %1399 = vmatmul.f32.gmra.mxu0 %v739
        %v1400 = vpop.f32.mrf.mxu0
        %v1401 = vadd.f32 0.0, %v1400
        %1402 = vmatmul.f32.gmra.mxu0 %v741
        %v1403 = vpop.f32.mrf.mxu0
        %v1404 = vadd.f32 0.0, %v1403
        %1405 = vmatmul.f32.gmra.mxu0 %v744
        %v1406 = vpop.f32.mrf.mxu0
        %v1407 = vadd.f32 0.0, %v1406
        %1408 = vmatmul.f32.gmra.mxu0 %v746
        %v1409 = vpop.f32.mrf.mxu0
        %v1410 = vadd.f32 0.0, %v1409
        %1411 = vmatmul.f32.gmra.mxu0 %v749
        %v1412 = vpop.f32.mrf.mxu0
        %v1413 = vadd.f32 0.0, %v1412
        %1414 = vmatmul.f32.gmra.mxu0 %v751
        %v1415 = vpop.f32.mrf.mxu0
        %v1416 = vadd.f32 0.0, %v1415
        %1417 = vmatmul.f32.gmra.mxu0 %v754
        %v1418 = vpop.f32.mrf.mxu0
        %v1419 = vadd.f32 0.0, %v1418
        %1420 = vmatmul.f32.gmra.mxu0 %v756
        %v1421 = vpop.f32.mrf.mxu0
        %v1422 = vadd.f32 0.0, %v1421
        %1423 = vmatmul.f32.gmra.mxu0 %v759
        %v1424 = vpop.f32.mrf.mxu0
        %v1425 = vadd.f32 0.0, %v1424
        %1426 = vmatmul.f32.gmra.mxu0 %v761
        %v1427 = vpop.f32.mrf.mxu0
        %v1428 = vadd.f32 0.0, %v1427
        %1429 = vmatmul.f32.gmra.mxu0 %v764
        %v1430 = vpop.f32.mrf.mxu0
        %v1431 = vadd.f32 0.0, %v1430
        %1432 = vmatmul.f32.gmra.mxu0 %v766
        %v1433 = vpop.f32.mrf.mxu0
        %v1434 = vadd.f32 0.0, %v1433
        %1435 = vmatmul.f32.gmra.mxu0 %v769
        %v1436 = vpop.f32.mrf.mxu0
        %v1437 = vadd.f32 0.0, %v1436
        %1438 = vmatmul.f32.gmra.mxu0 %v771
        %v1439 = vpop.f32.mrf.mxu0
        %v1440 = vadd.f32 0.0, %v1439
        %1441 = vmatmul.f32.gmra.mxu0 %v1312
        %v1442 = vpop.f32.mrf.mxu0
        %v1443 = vadd.f32 0.0, %v1442
        %1444 = vmatmul.f32.gmra.mxu0 %v1314
        %v1445 = vpop.f32.mrf.mxu0
        %v1446 = vadd.f32 0.0, %v1445
        %1447 = vmatmul.f32.gmra.mxu0 %v1317
        %v1448 = vpop.f32.mrf.mxu0
        %v1449 = vadd.f32 0.0, %v1448
        %1450 = vmatmul.f32.gmra.mxu0 %v1319
        %v1451 = vpop.f32.mrf.mxu0
        %v1452 = vadd.f32 0.0, %v1451
        %1453 = vdwg.mxu0
        %v1454 = vadd.f32 %v1278, %v1359
        %v1455 = vadd.f32 %v1279, %v1362
        %v1456 = vadd.f32 %v1280, %v1365
        %v1457 = vadd.f32 %v1281, %v1368
        %v1458 = vadd.f32 %v1282, %v1371
        %v1459 = vadd.f32 %v1283, %v1374
        %v1460 = vadd.f32 %v1284, %v1377
        %v1461 = vadd.f32 %v1285, %v1380
        %v1462 = vadd.f32 %v1286, %v1383
        %v1463 = vadd.f32 %v1287, %v1386
        %v1464 = vadd.f32 %v1288, %v1389
        %v1465 = vadd.f32 %v1289, %v1392
        %v1466 = vadd.f32 %v1290, %v1395
        %v1467 = vadd.f32 %v1291, %v1398
        %v1468 = vadd.f32 %v1292, %v1401
        %v1469 = vadd.f32 %v1293, %v1404
        %v1470 = vadd.f32 %v1294, %v1407
        %v1471 = vadd.f32 %v1295, %v1410
        %v1472 = vadd.f32 %v1296, %v1413
        %v1473 = vadd.f32 %v1297, %v1416
        %v1474 = vadd.f32 %v1298, %v1419
        %v1475 = vadd.f32 %v1299, %v1422
        %v1476 = vadd.f32 %v1300, %v1425
        %v1477 = vadd.f32 %v1301, %v1428
        %v1478 = vadd.f32 %v1302, %v1431
        %v1479 = vadd.f32 %v1303, %v1434
        %v1480 = vadd.f32 %v1304, %v1437
        %v1481 = vadd.f32 %v1305, %v1440
        %v1482 = vadd.f32 %v1306, %v1443
        %v1483 = vadd.f32 %v1307, %v1446
        %v1484 = vadd.f32 %v1308, %v1449
        %v1485 = vadd.f32 %v1309, %v1452
        %s1486 = scalar_lea.vmem %s1, 768
        %v1487 = vld [vmem:[%s1486] sm:$0xff]
        %v1488 = vld [vmem:[%s1486 + $0x8] sm:$0xff]
        %v1489 = vld [vmem:[%s1486 + $0x10] sm:$0xff]
        %v1490 = vld [vmem:[%s1486 + $0x18] sm:$0xff]
        %v1491 = vld [vmem:[%s1486 + $0x20] sm:$0xff]
        %v1492 = vld [vmem:[%s1486 + $0x28] sm:$0xff]
        %v1493 = vld [vmem:[%s1486 + $0x30] sm:$0xff]
        %v1494 = vld [vmem:[%s1486 + $0x38] sm:$0xff]
        %v1495 = vld [vmem:[%s1486 + $0x40] sm:$0xff]
        %v1496 = vld [vmem:[%s1486 + $0x48] sm:$0xff]
        %v1497 = vld [vmem:[%s1486 + $0x50] sm:$0xff]
        %v1498 = vld [vmem:[%s1486 + $0x58] sm:$0xff]
        %v1499 = vld [vmem:[%s1486 + $0x60] sm:$0xff]
        %v1500 = vld [vmem:[%s1486 + $0x68] sm:$0xff]
        %v1501 = vld [vmem:[%s1486 + $0x70] sm:$0xff]
        %v1502 = vld [vmem:[%s1486 + $0x78] sm:$0xff]
        %1503 = vmatpush.msra.mxu0 %v1502
        %1504 = vmatpush.msra.mxu0 %v1501
        %1505 = vmatpush.msra.mxu0 %v1500
        %1506 = vmatpush.msra.mxu0 %v1499
        %1507 = vmatpush.msra.mxu0 %v1498
        %1508 = vmatpush.msra.mxu0 %v1497
        %1509 = vmatpush.msra.mxu0 %v1496
        %1510 = vmatpush.msra.mxu0 %v1495
        %1511 = vmatpush.msra.mxu0 %v1494
        %1512 = vmatpush.msra.mxu0 %v1493
        %1513 = vmatpush.msra.mxu0 %v1492
        %1514 = vmatpush.msra.mxu0 %v1491
        %1515 = vmatpush.msra.mxu0 %v1490
        %1516 = vmatpush.msra.mxu0 %v1489
        %1517 = vmatpush.msra.mxu0 %v1488
        %1518 = vmatpush.msra.mxu0 %v1487
        %1519 = vmatmul.f32.gmra.mxu0 %v223
        %v1520 = vpop.f32.mrf.mxu0
        %v1521 = vadd.f32 0.0, %v1520
        %1522 = vmatmul.f32.gmra.mxu0 %v224
        %v1523 = vpop.f32.mrf.mxu0
        %v1524 = vadd.f32 0.0, %v1523
        %1525 = vmatmul.f32.gmra.mxu0 %v226
        %v1526 = vpop.f32.mrf.mxu0
        %v1527 = vadd.f32 0.0, %v1526
        %1528 = vmatmul.f32.gmra.mxu0 %v227
        %v1529 = vpop.f32.mrf.mxu0
        %v1530 = vadd.f32 0.0, %v1529
        %1531 = vmatmul.f32.gmra.mxu0 %v229
        %v1532 = vpop.f32.mrf.mxu0
        %v1533 = vadd.f32 0.0, %v1532
        %1534 = vmatmul.f32.gmra.mxu0 %v230
        %v1535 = vpop.f32.mrf.mxu0
        %v1536 = vadd.f32 0.0, %v1535
        %1537 = vmatmul.f32.gmra.mxu0 %v232
        %v1538 = vpop.f32.mrf.mxu0
        %v1539 = vadd.f32 0.0, %v1538
        %1540 = vmatmul.f32.gmra.mxu0 %v233
        %v1541 = vpop.f32.mrf.mxu0
        %v1542 = vadd.f32 0.0, %v1541
        %1543 = vmatmul.f32.gmra.mxu0 %v235
        %v1544 = vpop.f32.mrf.mxu0
        %v1545 = vadd.f32 0.0, %v1544
        %1546 = vmatmul.f32.gmra.mxu0 %v236
        %v1547 = vpop.f32.mrf.mxu0
        %v1548 = vadd.f32 0.0, %v1547
        %1549 = vmatmul.f32.gmra.mxu0 %v238
        %v1550 = vpop.f32.mrf.mxu0
        %v1551 = vadd.f32 0.0, %v1550
        %1552 = vmatmul.f32.gmra.mxu0 %v239
        %v1553 = vpop.f32.mrf.mxu0
        %v1554 = vadd.f32 0.0, %v1553
        %1555 = vmatmul.f32.gmra.mxu0 %v241
        %v1556 = vpop.f32.mrf.mxu0
        %v1557 = vadd.f32 0.0, %v1556
        %1558 = vmatmul.f32.gmra.mxu0 %v242
        %v1559 = vpop.f32.mrf.mxu0
        %v1560 = vadd.f32 0.0, %v1559
        %1561 = vmatmul.f32.gmra.mxu0 %v244
        %v1562 = vpop.f32.mrf.mxu0
        %v1563 = vadd.f32 0.0, %v1562
        %1564 = vmatmul.f32.gmra.mxu0 %v245
        %v1565 = vpop.f32.mrf.mxu0
        %v1566 = vadd.f32 0.0, %v1565
        %1567 = vmatmul.f32.gmra.mxu0 %v247
        %v1568 = vpop.f32.mrf.mxu0
        %v1569 = vadd.f32 0.0, %v1568
        %1570 = vmatmul.f32.gmra.mxu0 %v248
        %v1571 = vpop.f32.mrf.mxu0
        %v1572 = vadd.f32 0.0, %v1571
        %1573 = vmatmul.f32.gmra.mxu0 %v250
        %v1574 = vpop.f32.mrf.mxu0
        %v1575 = vadd.f32 0.0, %v1574
        %1576 = vmatmul.f32.gmra.mxu0 %v251
        %v1577 = vpop.f32.mrf.mxu0
        %v1578 = vadd.f32 0.0, %v1577
        %1579 = vmatmul.f32.gmra.mxu0 %v253
        %v1580 = vpop.f32.mrf.mxu0
        %v1581 = vadd.f32 0.0, %v1580
        %1582 = vmatmul.f32.gmra.mxu0 %v254
        %v1583 = vpop.f32.mrf.mxu0
        %v1584 = vadd.f32 0.0, %v1583
        %1585 = vmatmul.f32.gmra.mxu0 %v256
        %v1586 = vpop.f32.mrf.mxu0
        %v1587 = vadd.f32 0.0, %v1586
        %1588 = vmatmul.f32.gmra.mxu0 %v257
        %v1589 = vpop.f32.mrf.mxu0
        %v1590 = vadd.f32 0.0, %v1589
        %1591 = vmatmul.f32.gmra.mxu0 %v259
        %v1592 = vpop.f32.mrf.mxu0
        %v1593 = vadd.f32 0.0, %v1592
        %1594 = vmatmul.f32.gmra.mxu0 %v260
        %v1595 = vpop.f32.mrf.mxu0
        %v1596 = vadd.f32 0.0, %v1595
        %1597 = vmatmul.f32.gmra.mxu0 %v262
        %v1598 = vpop.f32.mrf.mxu0
        %v1599 = vadd.f32 0.0, %v1598
        %1600 = vmatmul.f32.gmra.mxu0 %v263
        %v1601 = vpop.f32.mrf.mxu0
        %v1602 = vadd.f32 0.0, %v1601
        %1603 = vmatmul.f32.gmra.mxu0 %v265
        %v1604 = vpop.f32.mrf.mxu0
        %v1605 = vadd.f32 0.0, %v1604
        %1606 = vmatmul.f32.gmra.mxu0 %v266
        %v1607 = vpop.f32.mrf.mxu0
        %v1608 = vadd.f32 0.0, %v1607
        %1609 = vmatmul.f32.gmra.mxu0 %v268
        %v1610 = vpop.f32.mrf.mxu0
        %v1611 = vadd.f32 0.0, %v1610
        %1612 = vmatmul.f32.gmra.mxu0 %v269
        %v1613 = vpop.f32.mrf.mxu0
        %v1614 = vadd.f32 0.0, %v1613
        %1615 = vdwg.mxu0
        %v1616 = vadd.f32 %v1454, %v1521
        %v1617 = vadd.f32 %v1455, %v1524
        %v1618 = vadd.f32 %v1456, %v1527
        %v1619 = vadd.f32 %v1457, %v1530
        %v1620 = vadd.f32 %v1458, %v1533
        %v1621 = vadd.f32 %v1459, %v1536
        %v1622 = vadd.f32 %v1460, %v1539
        %v1623 = vadd.f32 %v1461, %v1542
        %v1624 = vadd.f32 %v1462, %v1545
        %v1625 = vadd.f32 %v1463, %v1548
        %v1626 = vadd.f32 %v1464, %v1551
        %v1627 = vadd.f32 %v1465, %v1554
        %v1628 = vadd.f32 %v1466, %v1557
        %v1629 = vadd.f32 %v1467, %v1560
        %v1630 = vadd.f32 %v1468, %v1563
        %v1631 = vadd.f32 %v1469, %v1566
        %v1632 = vadd.f32 %v1470, %v1569
        %v1633 = vadd.f32 %v1471, %v1572
        %v1634 = vadd.f32 %v1472, %v1575
        %v1635 = vadd.f32 %v1473, %v1578
        %v1636 = vadd.f32 %v1474, %v1581
        %v1637 = vadd.f32 %v1475, %v1584
        %v1638 = vadd.f32 %v1476, %v1587
        %v1639 = vadd.f32 %v1477, %v1590
        %v1640 = vadd.f32 %v1478, %v1593
        %v1641 = vadd.f32 %v1479, %v1596
        %v1642 = vadd.f32 %v1480, %v1599
        %v1643 = vadd.f32 %v1481, %v1602
        %v1644 = vadd.f32 %v1482, %v1605
        %v1645 = vadd.f32 %v1483, %v1608
        %v1646 = vadd.f32 %v1484, %v1611
        %v1647 = vadd.f32 %v1485, %v1614
        %v1654 = vrot.slane %v265, 2
        %v1655 = vrot.slane %v266, 2
        %v1656 = vsel %vm335, %v1654, %v1655
        %v1657 = vrot.slane %v267, 2
        %v1658 = vsel %vm335, %v1655, %v1657
        %v1659 = vrot.slane %v268, 2
        %v1660 = vrot.slane %v269, 2
        %v1661 = vsel %vm335, %v1659, %v1660
        %v1662 = vrot.slane %v270, 2
        %v1663 = vsel %vm335, %v1660, %v1662
        %s1668 = scalar_lea.vmem %s1, 896
        %v1669 = vld [vmem:[%s1668] sm:$0xff]
        %v1670 = vld [vmem:[%s1668 + $0x8] sm:$0xff]
        %v1671 = vld [vmem:[%s1668 + $0x10] sm:$0xff]
        %v1672 = vld [vmem:[%s1668 + $0x18] sm:$0xff]
        %v1673 = vld [vmem:[%s1668 + $0x20] sm:$0xff]
        %v1674 = vld [vmem:[%s1668 + $0x28] sm:$0xff]
        %v1675 = vld [vmem:[%s1668 + $0x30] sm:$0xff]
        %v1676 = vld [vmem:[%s1668 + $0x38] sm:$0xff]
        %v1677 = vld [vmem:[%s1668 + $0x40] sm:$0xff]
        %v1678 = vld [vmem:[%s1668 + $0x48] sm:$0xff]
        %v1679 = vld [vmem:[%s1668 + $0x50] sm:$0xff]
        %v1680 = vld [vmem:[%s1668 + $0x58] sm:$0xff]
        %v1681 = vld [vmem:[%s1668 + $0x60] sm:$0xff]
        %v1682 = vld [vmem:[%s1668 + $0x68] sm:$0xff]
        %v1683 = vld [vmem:[%s1668 + $0x70] sm:$0xff]
        %v1684 = vld [vmem:[%s1668 + $0x78] sm:$0xff]
        %1685 = vmatpush.msra.mxu0 %v1684
        %1686 = vmatpush.msra.mxu0 %v1683
        %1687 = vmatpush.msra.mxu0 %v1682
        %1688 = vmatpush.msra.mxu0 %v1681
        %1689 = vmatpush.msra.mxu0 %v1680
        %1690 = vmatpush.msra.mxu0 %v1679
        %1691 = vmatpush.msra.mxu0 %v1678
        %1692 = vmatpush.msra.mxu0 %v1677
        %1693 = vmatpush.msra.mxu0 %v1676
        %1694 = vmatpush.msra.mxu0 %v1675
        %1695 = vmatpush.msra.mxu0 %v1674
        %1696 = vmatpush.msra.mxu0 %v1673
        %1697 = vmatpush.msra.mxu0 %v1672
        %1698 = vmatpush.msra.mxu0 %v1671
        %1699 = vmatpush.msra.mxu0 %v1670
        %1700 = vmatpush.msra.mxu0 %v1669
        %1701 = vmatmul.f32.gmra.mxu0 %v358
        %v1702 = vpop.f32.mrf.mxu0
        %v1703 = vadd.f32 0.0, %v1702
        %1704 = vmatmul.f32.gmra.mxu0 %v360
        %v1705 = vpop.f32.mrf.mxu0
        %v1706 = vadd.f32 0.0, %v1705
        %1707 = vmatmul.f32.gmra.mxu0 %v363
        %v1708 = vpop.f32.mrf.mxu0
        %v1709 = vadd.f32 0.0, %v1708
        %1710 = vmatmul.f32.gmra.mxu0 %v365
        %v1711 = vpop.f32.mrf.mxu0
        %v1712 = vadd.f32 0.0, %v1711
        %1713 = vmatmul.f32.gmra.mxu0 %v368
        %v1714 = vpop.f32.mrf.mxu0
        %v1715 = vadd.f32 0.0, %v1714
        %1716 = vmatmul.f32.gmra.mxu0 %v370
        %v1717 = vpop.f32.mrf.mxu0
        %v1718 = vadd.f32 0.0, %v1717
        %1719 = vmatmul.f32.gmra.mxu0 %v373
        %v1720 = vpop.f32.mrf.mxu0
        %v1721 = vadd.f32 0.0, %v1720
        %1722 = vmatmul.f32.gmra.mxu0 %v375
        %v1723 = vpop.f32.mrf.mxu0
        %v1724 = vadd.f32 0.0, %v1723
        %1725 = vmatmul.f32.gmra.mxu0 %v378
        %v1726 = vpop.f32.mrf.mxu0
        %v1727 = vadd.f32 0.0, %v1726
        %1728 = vmatmul.f32.gmra.mxu0 %v380
        %v1729 = vpop.f32.mrf.mxu0
        %v1730 = vadd.f32 0.0, %v1729
        %1731 = vmatmul.f32.gmra.mxu0 %v383
        %v1732 = vpop.f32.mrf.mxu0
        %v1733 = vadd.f32 0.0, %v1732
        %1734 = vmatmul.f32.gmra.mxu0 %v385
        %v1735 = vpop.f32.mrf.mxu0
        %v1736 = vadd.f32 0.0, %v1735
        %1737 = vmatmul.f32.gmra.mxu0 %v388
        %v1738 = vpop.f32.mrf.mxu0
        %v1739 = vadd.f32 0.0, %v1738
        %1740 = vmatmul.f32.gmra.mxu0 %v390
        %v1741 = vpop.f32.mrf.mxu0
        %v1742 = vadd.f32 0.0, %v1741
        %1743 = vmatmul.f32.gmra.mxu0 %v393
        %v1744 = vpop.f32.mrf.mxu0
        %v1745 = vadd.f32 0.0, %v1744
        %1746 = vmatmul.f32.gmra.mxu0 %v395
        %v1747 = vpop.f32.mrf.mxu0
        %v1748 = vadd.f32 0.0, %v1747
        %1749 = vmatmul.f32.gmra.mxu0 %v398
        %v1750 = vpop.f32.mrf.mxu0
        %v1751 = vadd.f32 0.0, %v1750
        %1752 = vmatmul.f32.gmra.mxu0 %v400
        %v1753 = vpop.f32.mrf.mxu0
        %v1754 = vadd.f32 0.0, %v1753
        %1755 = vmatmul.f32.gmra.mxu0 %v403
        %v1756 = vpop.f32.mrf.mxu0
        %v1757 = vadd.f32 0.0, %v1756
        %1758 = vmatmul.f32.gmra.mxu0 %v405
        %v1759 = vpop.f32.mrf.mxu0
        %v1760 = vadd.f32 0.0, %v1759
        %1761 = vmatmul.f32.gmra.mxu0 %v408
        %v1762 = vpop.f32.mrf.mxu0
        %v1763 = vadd.f32 0.0, %v1762
        %1764 = vmatmul.f32.gmra.mxu0 %v410
        %v1765 = vpop.f32.mrf.mxu0
        %v1766 = vadd.f32 0.0, %v1765
        %1767 = vmatmul.f32.gmra.mxu0 %v413
        %v1768 = vpop.f32.mrf.mxu0
        %v1769 = vadd.f32 0.0, %v1768
        %1770 = vmatmul.f32.gmra.mxu0 %v415
        %v1771 = vpop.f32.mrf.mxu0
        %v1772 = vadd.f32 0.0, %v1771
        %1773 = vmatmul.f32.gmra.mxu0 %v1136
        %v1774 = vpop.f32.mrf.mxu0
        %v1775 = vadd.f32 0.0, %v1774
        %1776 = vmatmul.f32.gmra.mxu0 %v1138
        %v1777 = vpop.f32.mrf.mxu0
        %v1778 = vadd.f32 0.0, %v1777
        %1779 = vmatmul.f32.gmra.mxu0 %v1141
        %v1780 = vpop.f32.mrf.mxu0
        %v1781 = vadd.f32 0.0, %v1780
        %1782 = vmatmul.f32.gmra.mxu0 %v1143
        %v1783 = vpop.f32.mrf.mxu0
        %v1784 = vadd.f32 0.0, %v1783
        %1785 = vmatmul.f32.gmra.mxu0 %v1656
        %v1786 = vpop.f32.mrf.mxu0
        %v1787 = vadd.f32 0.0, %v1786
        %1788 = vmatmul.f32.gmra.mxu0 %v1658
        %v1789 = vpop.f32.mrf.mxu0
        %v1790 = vadd.f32 0.0, %v1789
        %1791 = vmatmul.f32.gmra.mxu0 %v1661
        %v1792 = vpop.f32.mrf.mxu0
        %v1793 = vadd.f32 0.0, %v1792
        %1794 = vmatmul.f32.gmra.mxu0 %v1663
        %v1795 = vpop.f32.mrf.mxu0
        %v1796 = vadd.f32 0.0, %v1795
        %1797 = vdwg.mxu0
        %v1798 = vadd.f32 %v1616, %v1703
        %v1799 = vadd.f32 %v1617, %v1706
        %v1800 = vadd.f32 %v1618, %v1709
        %v1801 = vadd.f32 %v1619, %v1712
        %v1802 = vadd.f32 %v1620, %v1715
        %v1803 = vadd.f32 %v1621, %v1718
        %v1804 = vadd.f32 %v1622, %v1721
        %v1805 = vadd.f32 %v1623, %v1724
        %v1806 = vadd.f32 %v1624, %v1727
        %v1807 = vadd.f32 %v1625, %v1730
        %v1808 = vadd.f32 %v1626, %v1733
        %v1809 = vadd.f32 %v1627, %v1736
        %v1810 = vadd.f32 %v1628, %v1739
        %v1811 = vadd.f32 %v1629, %v1742
        %v1812 = vadd.f32 %v1630, %v1745
        %v1813 = vadd.f32 %v1631, %v1748
        %v1814 = vadd.f32 %v1632, %v1751
        %v1815 = vadd.f32 %v1633, %v1754
        %v1816 = vadd.f32 %v1634, %v1757
        %v1817 = vadd.f32 %v1635, %v1760
        %v1818 = vadd.f32 %v1636, %v1763
        %v1819 = vadd.f32 %v1637, %v1766
        %v1820 = vadd.f32 %v1638, %v1769
        %v1821 = vadd.f32 %v1639, %v1772
        %v1822 = vadd.f32 %v1640, %v1775
        %v1823 = vadd.f32 %v1641, %v1778
        %v1824 = vadd.f32 %v1642, %v1781
        %v1825 = vadd.f32 %v1643, %v1784
        %v1826 = vadd.f32 %v1644, %v1787
        %v1827 = vadd.f32 %v1645, %v1790
        %v1828 = vadd.f32 %v1646, %v1793
        %v1829 = vadd.f32 %v1647, %v1796
        %v1830 = vrot.slane %v265, 4
        %v1831 = vrot.slane %v266, 4
        %v1832 = vsel %vm691, %v1830, %v1831
        %v1833 = vrot.slane %v267, 4
        %v1834 = vsel %vm691, %v1831, %v1833
        %v1835 = vrot.slane %v268, 4
        %v1836 = vrot.slane %v269, 4
        %v1837 = vsel %vm691, %v1835, %v1836
        %v1838 = vrot.slane %v270, 4
        %v1839 = vsel %vm691, %v1836, %v1838
        %s1844 = scalar_lea.vmem %s1, 1024
        %v1845 = vld [vmem:[%s1844] sm:$0xff]
        %v1846 = vld [vmem:[%s1844 + $0x8] sm:$0xff]
        %v1847 = vld [vmem:[%s1844 + $0x10] sm:$0xff]
        %v1848 = vld [vmem:[%s1844 + $0x18] sm:$0xff]
        %v1849 = vld [vmem:[%s1844 + $0x20] sm:$0xff]
        %v1850 = vld [vmem:[%s1844 + $0x28] sm:$0xff]
        %v1851 = vld [vmem:[%s1844 + $0x30] sm:$0xff]
        %v1852 = vld [vmem:[%s1844 + $0x38] sm:$0xff]
        %v1853 = vld [vmem:[%s1844 + $0x40] sm:$0xff]
        %v1854 = vld [vmem:[%s1844 + $0x48] sm:$0xff]
        %v1855 = vld [vmem:[%s1844 + $0x50] sm:$0xff]
        %v1856 = vld [vmem:[%s1844 + $0x58] sm:$0xff]
        %v1857 = vld [vmem:[%s1844 + $0x60] sm:$0xff]
        %v1858 = vld [vmem:[%s1844 + $0x68] sm:$0xff]
        %v1859 = vld [vmem:[%s1844 + $0x70] sm:$0xff]
        %v1860 = vld [vmem:[%s1844 + $0x78] sm:$0xff]
        %1861 = vmatpush.msra.mxu0 %v1860
        %1862 = vmatpush.msra.mxu0 %v1859
        %1863 = vmatpush.msra.mxu0 %v1858
        %1864 = vmatpush.msra.mxu0 %v1857
        %1865 = vmatpush.msra.mxu0 %v1856
        %1866 = vmatpush.msra.mxu0 %v1855
        %1867 = vmatpush.msra.mxu0 %v1854
        %1868 = vmatpush.msra.mxu0 %v1853
        %1869 = vmatpush.msra.mxu0 %v1852
        %1870 = vmatpush.msra.mxu0 %v1851
        %1871 = vmatpush.msra.mxu0 %v1850
        %1872 = vmatpush.msra.mxu0 %v1849
        %1873 = vmatpush.msra.mxu0 %v1848
        %1874 = vmatpush.msra.mxu0 %v1847
        %1875 = vmatpush.msra.mxu0 %v1846
        %1876 = vmatpush.msra.mxu0 %v1845
        %1877 = vmatmul.f32.gmra.mxu0 %v714
        %v1878 = vpop.f32.mrf.mxu0
        %v1879 = vadd.f32 0.0, %v1878
        %1880 = vmatmul.f32.gmra.mxu0 %v716
        %v1881 = vpop.f32.mrf.mxu0
        %v1882 = vadd.f32 0.0, %v1881
        %1883 = vmatmul.f32.gmra.mxu0 %v719
        %v1884 = vpop.f32.mrf.mxu0
        %v1885 = vadd.f32 0.0, %v1884
        %1886 = vmatmul.f32.gmra.mxu0 %v721
        %v1887 = vpop.f32.mrf.mxu0
        %v1888 = vadd.f32 0.0, %v1887
        %1889 = vmatmul.f32.gmra.mxu0 %v724
        %v1890 = vpop.f32.mrf.mxu0
        %v1891 = vadd.f32 0.0, %v1890
        %1892 = vmatmul.f32.gmra.mxu0 %v726
        %v1893 = vpop.f32.mrf.mxu0
        %v1894 = vadd.f32 0.0, %v1893
        %1895 = vmatmul.f32.gmra.mxu0 %v729
        %v1896 = vpop.f32.mrf.mxu0
        %v1897 = vadd.f32 0.0, %v1896
        %1898 = vmatmul.f32.gmra.mxu0 %v731
        %v1899 = vpop.f32.mrf.mxu0
        %v1900 = vadd.f32 0.0, %v1899
        %1901 = vmatmul.f32.gmra.mxu0 %v734
        %v1902 = vpop.f32.mrf.mxu0
        %v1903 = vadd.f32 0.0, %v1902
        %1904 = vmatmul.f32.gmra.mxu0 %v736
        %v1905 = vpop.f32.mrf.mxu0
        %v1906 = vadd.f32 0.0, %v1905
        %1907 = vmatmul.f32.gmra.mxu0 %v739
        %v1908 = vpop.f32.mrf.mxu0
        %v1909 = vadd.f32 0.0, %v1908
        %1910 = vmatmul.f32.gmra.mxu0 %v741
        %v1911 = vpop.f32.mrf.mxu0
        %v1912 = vadd.f32 0.0, %v1911
        %1913 = vmatmul.f32.gmra.mxu0 %v744
        %v1914 = vpop.f32.mrf.mxu0
        %v1915 = vadd.f32 0.0, %v1914
        %1916 = vmatmul.f32.gmra.mxu0 %v746
        %v1917 = vpop.f32.mrf.mxu0
        %v1918 = vadd.f32 0.0, %v1917
        %1919 = vmatmul.f32.gmra.mxu0 %v749
        %v1920 = vpop.f32.mrf.mxu0
        %v1921 = vadd.f32 0.0, %v1920
        %1922 = vmatmul.f32.gmra.mxu0 %v751
        %v1923 = vpop.f32.mrf.mxu0
        %v1924 = vadd.f32 0.0, %v1923
        %1925 = vmatmul.f32.gmra.mxu0 %v754
        %v1926 = vpop.f32.mrf.mxu0
        %v1927 = vadd.f32 0.0, %v1926
        %1928 = vmatmul.f32.gmra.mxu0 %v756
        %v1929 = vpop.f32.mrf.mxu0
        %v1930 = vadd.f32 0.0, %v1929
        %1931 = vmatmul.f32.gmra.mxu0 %v759
        %v1932 = vpop.f32.mrf.mxu0
        %v1933 = vadd.f32 0.0, %v1932
        %1934 = vmatmul.f32.gmra.mxu0 %v761
        %v1935 = vpop.f32.mrf.mxu0
        %v1936 = vadd.f32 0.0, %v1935
        %1937 = vmatmul.f32.gmra.mxu0 %v764
        %v1938 = vpop.f32.mrf.mxu0
        %v1939 = vadd.f32 0.0, %v1938
        %1940 = vmatmul.f32.gmra.mxu0 %v766
        %v1941 = vpop.f32.mrf.mxu0
        %v1942 = vadd.f32 0.0, %v1941
        %1943 = vmatmul.f32.gmra.mxu0 %v769
        %v1944 = vpop.f32.mrf.mxu0
        %v1945 = vadd.f32 0.0, %v1944
        %1946 = vmatmul.f32.gmra.mxu0 %v771
        %v1947 = vpop.f32.mrf.mxu0
        %v1948 = vadd.f32 0.0, %v1947
        %1949 = vmatmul.f32.gmra.mxu0 %v1312
        %v1950 = vpop.f32.mrf.mxu0
        %v1951 = vadd.f32 0.0, %v1950
        %1952 = vmatmul.f32.gmra.mxu0 %v1314
        %v1953 = vpop.f32.mrf.mxu0
        %v1954 = vadd.f32 0.0, %v1953
        %1955 = vmatmul.f32.gmra.mxu0 %v1317
        %v1956 = vpop.f32.mrf.mxu0
        %v1957 = vadd.f32 0.0, %v1956
        %1958 = vmatmul.f32.gmra.mxu0 %v1319
        %v1959 = vpop.f32.mrf.mxu0
        %v1960 = vadd.f32 0.0, %v1959
        %1961 = vmatmul.f32.gmra.mxu0 %v1832
        %v1962 = vpop.f32.mrf.mxu0
        %v1963 = vadd.f32 0.0, %v1962
        %1964 = vmatmul.f32.gmra.mxu0 %v1834
        %v1965 = vpop.f32.mrf.mxu0
        %v1966 = vadd.f32 0.0, %v1965
        %1967 = vmatmul.f32.gmra.mxu0 %v1837
        %v1968 = vpop.f32.mrf.mxu0
        %v1969 = vadd.f32 0.0, %v1968
        %1970 = vmatmul.f32.gmra.mxu0 %v1839
        %v1971 = vpop.f32.mrf.mxu0
        %v1972 = vadd.f32 0.0, %v1971
        %1973 = vdwg.mxu0
        %v1974 = vadd.f32 %v1798, %v1879
        %v1975 = vadd.f32 %v1799, %v1882
        %v1976 = vadd.f32 %v1800, %v1885
        %v1977 = vadd.f32 %v1801, %v1888
        %v1978 = vadd.f32 %v1802, %v1891
        %v1979 = vadd.f32 %v1803, %v1894
        %v1980 = vadd.f32 %v1804, %v1897
        %v1981 = vadd.f32 %v1805, %v1900
        %v1982 = vadd.f32 %v1806, %v1903
        %v1983 = vadd.f32 %v1807, %v1906
        %v1984 = vadd.f32 %v1808, %v1909
        %v1985 = vadd.f32 %v1809, %v1912
        %v1986 = vadd.f32 %v1810, %v1915
        %v1987 = vadd.f32 %v1811, %v1918
        %v1988 = vadd.f32 %v1812, %v1921
        %v1989 = vadd.f32 %v1813, %v1924
        %v1990 = vadd.f32 %v1814, %v1927
        %v1991 = vadd.f32 %v1815, %v1930
        %v1992 = vadd.f32 %v1816, %v1933
        %v1993 = vadd.f32 %v1817, %v1936
        %v1994 = vadd.f32 %v1818, %v1939
        %v1995 = vadd.f32 %v1819, %v1942
        %v1996 = vadd.f32 %v1820, %v1945
        %v1997 = vadd.f32 %v1821, %v1948
        %v1998 = vadd.f32 %v1822, %v1951
        %v1999 = vadd.f32 %v1823, %v1954
        %v2000 = vadd.f32 %v1824, %v1957
        %v2001 = vadd.f32 %v1825, %v1960
        %v2002 = vadd.f32 %v1826, %v1963
        %v2003 = vadd.f32 %v1827, %v1966
        %v2004 = vadd.f32 %v1828, %v1969
        %v2005 = vadd.f32 %v1829, %v1972
        %v2006 = vpack.c.bf16 %v1974, %v1974
        %v2007 = vpack.c.bf16 %v1975, %v1975
        %v2008 = vpack.c.bf16 %v1976, %v1976
        %v2009 = vpack.c.bf16 %v1977, %v1977
        %v2010 = vpack.c.bf16 %v1978, %v1978
        %v2011 = vpack.c.bf16 %v1979, %v1979
        %v2012 = vpack.c.bf16 %v1980, %v1980
        %v2013 = vpack.c.bf16 %v1981, %v1981
        %v2014 = vpack.c.bf16 %v1982, %v1982
        %v2015 = vpack.c.bf16 %v1983, %v1983
        %v2016 = vpack.c.bf16 %v1984, %v1984
        %v2017 = vpack.c.bf16 %v1985, %v1985
        %v2018 = vpack.c.bf16 %v1986, %v1986
        %v2019 = vpack.c.bf16 %v1987, %v1987
        %v2020 = vpack.c.bf16 %v1988, %v1988
        %v2021 = vpack.c.bf16 %v1989, %v1989
        %v2022 = vpack.c.bf16 %v1990, %v1990
        %v2023 = vpack.c.bf16 %v1991, %v1991
        %v2024 = vpack.c.bf16 %v1992, %v1992
        %v2025 = vpack.c.bf16 %v1993, %v1993
        %v2026 = vpack.c.bf16 %v1994, %v1994
        %v2027 = vpack.c.bf16 %v1995, %v1995
        %v2028 = vpack.c.bf16 %v1996, %v1996
        %v2029 = vpack.c.bf16 %v1997, %v1997
        %v2030 = vpack.c.bf16 %v1998, %v1998
        %v2031 = vpack.c.bf16 %v1999, %v1999
        %v2032 = vpack.c.bf16 %v2000, %v2000
        %v2033 = vpack.c.bf16 %v2001, %v2001
        %v2034 = vpack.c.bf16 %v2002, %v2002
        %v2035 = vpack.c.bf16 %v2003, %v2003
        %v2036 = vpack.c.bf16 %v2004, %v2004
        %v2037 = vpack.c.bf16 %v2005, %v2005
        %2038 = vst [vmem:[%s193] sm:$0xf] %v2006
        %2039 = vst [vmem:[%s193 + $0x4] sm:$0xf] %v2007
        %2040 = vst [vmem:[%s193 + $0x8] sm:$0xf] %v2008
        %2041 = vst [vmem:[%s193 + $0xc] sm:$0xf] %v2009
        %2042 = vst [vmem:[%s193 + $0x10] sm:$0xf] %v2010
        %2043 = vst [vmem:[%s193 + $0x14] sm:$0xf] %v2011
        %2044 = vst [vmem:[%s193 + $0x18] sm:$0xf] %v2012
        %2045 = vst [vmem:[%s193 + $0x1c] sm:$0xf] %v2013
        %2046 = vst [vmem:[%s193 + $0x20] sm:$0xf] %v2014
        %2047 = vst [vmem:[%s193 + $0x24] sm:$0xf] %v2015
        %2048 = vst [vmem:[%s193 + $0x28] sm:$0xf] %v2016
        %2049 = vst [vmem:[%s193 + $0x2c] sm:$0xf] %v2017
        %2050 = vst [vmem:[%s193 + $0x30] sm:$0xf] %v2018
        %2051 = vst [vmem:[%s193 + $0x34] sm:$0xf] %v2019
        %2052 = vst [vmem:[%s193 + $0x38] sm:$0xf] %v2020
        %2053 = vst [vmem:[%s193 + $0x3c] sm:$0xf] %v2021
        %2054 = vst [vmem:[%s193 + $0x40] sm:$0xf] %v2022
        %2055 = vst [vmem:[%s193 + $0x44] sm:$0xf] %v2023
        %2056 = vst [vmem:[%s193 + $0x48] sm:$0xf] %v2024
        %2057 = vst [vmem:[%s193 + $0x4c] sm:$0xf] %v2025
        %2058 = vst [vmem:[%s193 + $0x50] sm:$0xf] %v2026
        %2059 = vst [vmem:[%s193 + $0x54] sm:$0xf] %v2027
        %2060 = vst [vmem:[%s193 + $0x58] sm:$0xf] %v2028
        %2061 = vst [vmem:[%s193 + $0x5c] sm:$0xf] %v2029
        %2062 = vst [vmem:[%s193 + $0x60] sm:$0xf] %v2030
        %2063 = vst [vmem:[%s193 + $0x64] sm:$0xf] %v2031
        %2064 = vst [vmem:[%s193 + $0x68] sm:$0xf] %v2032
        %2065 = vst [vmem:[%s193 + $0x6c] sm:$0xf] %v2033
        %2066 = vst [vmem:[%s193 + $0x70] sm:$0xf] %v2034
        %2067 = vst [vmem:[%s193 + $0x74] sm:$0xf] %v2035
        %2068 = vst [vmem:[%s193 + $0x78] sm:$0xf] %v2036
        %2069 = vst [vmem:[%s193 + $0x7c] sm:$0xf] %v2037
        %v2070 = vadd.f32 %v1974, %v1975
        %v2071 = vadd.f32 %v2070, %v1976
        %v2072 = vadd.f32 %v2071, %v1977
        %v2073 = vadd.f32 %v2072, %v1978
        %v2074 = vadd.f32 %v2073, %v1979
        %v2075 = vadd.f32 %v2074, %v1980
        %v2076 = vadd.f32 %v2075, %v1981
        %v2077 = vadd.f32 %v2076, %v1982
        %v2078 = vadd.f32 %v2077, %v1983
        %v2079 = vadd.f32 %v2078, %v1984
        %v2080 = vadd.f32 %v2079, %v1985
        %v2081 = vadd.f32 %v2080, %v1986
        %v2082 = vadd.f32 %v2081, %v1987
        %v2083 = vadd.f32 %v2082, %v1988
        %v2084 = vadd.f32 %v2083, %v1989
        %v2085 = vadd.f32 %v2084, %v1990
        %v2086 = vadd.f32 %v2085, %v1991
        %v2087 = vadd.f32 %v2086, %v1992
        %v2088 = vadd.f32 %v2087, %v1993
        %v2089 = vadd.f32 %v2088, %v1994
        %v2090 = vadd.f32 %v2089, %v1995
        %v2091 = vadd.f32 %v2090, %v1996
        %v2092 = vadd.f32 %v2091, %v1997
        %v2093 = vadd.f32 %v2092, %v1998
        %v2094 = vadd.f32 %v2093, %v1999
        %v2095 = vadd.f32 %v2094, %v2000
        %v2096 = vadd.f32 %v2095, %v2001
        %v2097 = vadd.f32 %v2096, %v2002
        %v2098 = vadd.f32 %v2097, %v2003
        %v2099 = vadd.f32 %v2098, %v2004
        %v2100 = vadd.f32 %v2099, %v2005
        %v2101 = vrot.slane %v2100, 4
        %v2102 = vadd.f32 %v2100, %v2101
        %v2103 = vrot.slane %v2102, 2
        %v2104 = vadd.f32 %v2102, %v2103
        %v2105 = vrot.slane %v2104, 1
        %v2106 = vadd.f32 %v2104, %v2105
        %v2107 = vmul.f32 %v1974, %v1974
        %v2108 = vmul.f32 %v1975, %v1975
        %v2109 = vmul.f32 %v1976, %v1976
        %v2110 = vmul.f32 %v1977, %v1977
        %v2111 = vmul.f32 %v1978, %v1978
        %v2112 = vmul.f32 %v1979, %v1979
        %v2113 = vmul.f32 %v1980, %v1980
        %v2114 = vmul.f32 %v1981, %v1981
        %v2115 = vmul.f32 %v1982, %v1982
        %v2116 = vmul.f32 %v1983, %v1983
        %v2117 = vmul.f32 %v1984, %v1984
        %v2118 = vmul.f32 %v1985, %v1985
        %v2119 = vmul.f32 %v1986, %v1986
        %v2120 = vmul.f32 %v1987, %v1987
        %v2121 = vmul.f32 %v1988, %v1988
        %v2122 = vmul.f32 %v1989, %v1989
        %v2123 = vmul.f32 %v1990, %v1990
        %v2124 = vmul.f32 %v1991, %v1991
        %v2125 = vmul.f32 %v1992, %v1992
        %v2126 = vmul.f32 %v1993, %v1993
        %v2127 = vmul.f32 %v1994, %v1994
        %v2128 = vmul.f32 %v1995, %v1995
        %v2129 = vmul.f32 %v1996, %v1996
        %v2130 = vmul.f32 %v1997, %v1997
        %v2131 = vmul.f32 %v1998, %v1998
        %v2132 = vmul.f32 %v1999, %v1999
        %v2133 = vmul.f32 %v2000, %v2000
        %v2134 = vmul.f32 %v2001, %v2001
        %v2135 = vmul.f32 %v2002, %v2002
        %v2136 = vmul.f32 %v2003, %v2003
        %v2137 = vmul.f32 %v2004, %v2004
        %v2138 = vmul.f32 %v2005, %v2005
        %v2139 = vadd.f32 %v2107, %v2108
        %v2140 = vadd.f32 %v2139, %v2109
        %v2141 = vadd.f32 %v2140, %v2110
        %v2142 = vadd.f32 %v2141, %v2111
        %v2143 = vadd.f32 %v2142, %v2112
        %v2144 = vadd.f32 %v2143, %v2113
        %v2145 = vadd.f32 %v2144, %v2114
        %v2146 = vadd.f32 %v2145, %v2115
        %v2147 = vadd.f32 %v2146, %v2116
        %v2148 = vadd.f32 %v2147, %v2117
        %v2149 = vadd.f32 %v2148, %v2118
        %v2150 = vadd.f32 %v2149, %v2119
        %v2151 = vadd.f32 %v2150, %v2120
        %v2152 = vadd.f32 %v2151, %v2121
        %v2153 = vadd.f32 %v2152, %v2122
        %v2154 = vadd.f32 %v2153, %v2123
        %v2155 = vadd.f32 %v2154, %v2124
        %v2156 = vadd.f32 %v2155, %v2125
        %v2157 = vadd.f32 %v2156, %v2126
        %v2158 = vadd.f32 %v2157, %v2127
        %v2159 = vadd.f32 %v2158, %v2128
        %v2160 = vadd.f32 %v2159, %v2129
        %v2161 = vadd.f32 %v2160, %v2130
        %v2162 = vadd.f32 %v2161, %v2131
        %v2163 = vadd.f32 %v2162, %v2132
        %v2164 = vadd.f32 %v2163, %v2133
        %v2165 = vadd.f32 %v2164, %v2134
        %v2166 = vadd.f32 %v2165, %v2135
        %v2167 = vadd.f32 %v2166, %v2136
        %v2168 = vadd.f32 %v2167, %v2137
        %v2169 = vadd.f32 %v2168, %v2138
        %v2170 = vrot.slane %v2169, 4
        %v2171 = vadd.f32 %v2169, %v2170
        %v2172 = vrot.slane %v2171, 2
        %v2173 = vadd.f32 %v2171, %v2172
        %v2174 = vrot.slane %v2173, 1
        %v2175 = vadd.f32 %v2173, %v2174
        %vm2176 = vcmask 1040384
        %v2177 = vsel %vm2176, %v2106, %v2175
        %2178 = vst [vmem:[%s200] sm:$0x3] %v2177
        %s2179 = sand.u32 %s92, 1
        %s2180 = scalar_lea.sflag [#allocation3], %s2179
        %s2181 = sand.u32 %s92, 1
        %s2182 = smul.addr %s2181, 128
        %s2183 = scalar_lea.vmem [#allocation2], %s2182
        %s2184 = sand.u32 %s120, 1
        %s2185 = scalar_lea.sflag [#allocation5], %s2184
        %s2186 = sand.u32 %s120, 1
        %s2187 = smul.addr %s2186, 2
        %s2188 = scalar_lea.vmem [#allocation4], %s2187
        // Predicated region
        $region29: #{tpu_custom_call.1} parent=27 // pred_check
          %p2189 = pneg %p102
        $region30: #{tpu_custom_call.1} parent=27 // pred_check_branch
          %2191 = sbr.rel (%p2189) target = $region32
        $region31: #{tpu_custom_call.1} parent=27 // pred_region
          %s2192 = smul.u32 16, %s26
          %2194 = vsyncadd %s2180, 0
          %s2195 = smul.addr %s2192, 2
          %s2196 = smul.addr %s25, 32
          %s2197 = sadd.s32 %s2195, %s2196
          %s2198 = smul.addr %s2197, 4
          %s2199 = scalar_lea.hbm %s2, %s2198
          %s2200 = sshll.u32 %s2183, 4
          %s2201 = int_to_ptr.vmem [resolvable:$true] %s2200
          %s2202 = sshll.u32 %s2199, 4
          %s2203 = int_to_ptr.hbm [resolvable:$true] %s2202
          %2208 = dma.vmem_to_hbm [thread:$0]  %s2201, 2048, %s2203, %s2180, 64, 64, 4
        $region32: #{tpu_custom_call.1} parent=27 // pred_fallthru
          _
        // Predicated region
        $region33: #{tpu_custom_call.1} parent=27 // pred_check
          %p2209 = pneg %p130
        $region34: #{tpu_custom_call.1} parent=27 // pred_check_branch
          %2211 = sbr.rel (%p2209) target = $region36
        $region35: #{tpu_custom_call.1} parent=27 // pred_region
          %2213 = vsyncadd %s2185, 0
          %s2214 = sadd.s32 %s26, %s25
          %s2215 = smul.addr %s2214, 2
          %s2216 = scalar_lea.hbm %s3, %s2215
          %s2218 = sshll.u32 %s2188, 4
          %s2219 = int_to_ptr.vmem [resolvable:$true] %s2218
          %s2220 = sshll.u32 %s2216, 4
          %s2221 = int_to_ptr.hbm [resolvable:$true] %s2220
          %2223 = dma.vmem_to_hbm [thread:$0]  %s2219, 32, %s2221, %s2185
        $region36: #{tpu_custom_call.1} parent=27 // pred_fallthru
          _
      $region28: #{tpu_custom_call.1} parent=5 // pred_fallthru
        _
      %p2224 = scmp.le.s32.totalorder 2, %s16
      // Predicated region
      $region37: #{tpu_custom_call.1} parent=5 // pred_check
        %p2225 = pneg %p2224
      $region38: #{tpu_custom_call.1} parent=5 // pred_check_branch
        %2227 = sbr.rel (%p2225) target = $region40
      $region39: #{tpu_custom_call.1} parent=5 // pred_region
        %s2228 = ssub.s32 %s16, 2
        // Predicated region
        $region41: #{tpu_custom_call.1} parent=39 // pred_check
          %p2229 = pneg %p108
        $region42: #{tpu_custom_call.1} parent=39 // pred_check_branch
          %2231 = sbr.rel (%p2229) target = $region44
        $region43: #{tpu_custom_call.1} parent=39 // pred_region
          %s2232 = sand.u32 %s93, 1
          %s2233 = scalar_lea.sflag [#allocation3], %s2232
          %s2234 = sand.u32 %s93, 1
          %s2235 = smul.addr %s2234, 128
          %s2236 = scalar_lea.vmem [#allocation2], %s2235
          %2238 = dma.done %s2233, 2048
        $region44: #{tpu_custom_call.1} parent=39 // pred_fallthru
          _
        // Predicated region
        $region45: #{tpu_custom_call.1} parent=39 // pred_check
          %p2239 = pneg %p136
        $region46: #{tpu_custom_call.1} parent=39 // pred_check_branch
          %2241 = sbr.rel (%p2239) target = $region48
        $region47: #{tpu_custom_call.1} parent=39 // pred_region
          %s2242 = sand.u32 %s121, 1
          %s2243 = scalar_lea.sflag [#allocation5], %s2242
          %s2244 = sand.u32 %s121, 1
          %s2245 = smul.addr %s2244, 2
          %s2246 = scalar_lea.vmem [#allocation4], %s2245
          %2248 = dma.done %s2243, 32
        $region48: #{tpu_custom_call.1} parent=39 // pred_fallthru
          _
      $region40: #{tpu_custom_call.1} parent=5 // pred_fallthru
        _
    $region6: #{tpu_custom_call.1} parent=1 // loop_footer
      %s20 = sadd.s32 1, %s16
    $region7: #{tpu_custom_call.1} parent=1 // loop_footer_branch
      %15 = sbr.rel target = $region3
    $region8: #{tpu_custom_call.1} parent=1 // loop_exit
      _
    %2249 = vsyncpa [#allocation3], 1
    %s2250 = scalar_lea.sflag [#allocation3], 1
    %2251 = vsyncpa %s2250, 1
    %2252 = vsyncpa [#allocation5], 1
    %s2253 = scalar_lea.sflag [#allocation5], 1
    %2254 = vsyncpa %s2253, 1

</llo_original>
